<compile_context>
chip_gen: v7x
topology: tpu7x:2x2x1
jax: 0.10.0
libtpu: 0.0.40
codegen_flags: <defaults>
</compile_context>

<pallas_src>
import numpy as np
import jax
import jax.numpy as jnp
from jax.experimental import pallas as pl
from jax.experimental.pallas import tpu as pltpu

# Model dims implied by Linear(320, 64): 32 * (L/4) = 320  ->  L = 40.
L_IN = 40
C_IN = 16
C1, C2 = 16, 32
K = 5
PAD = 2
P1 = L_IN // 2      # 20  (after pool1)
P2 = P1 // 2        # 10  (after pool2)
HID = 64
OUT = 9
OUT_PAD = 128       # lane-dense output block; sliced back to OUT in the wrapper

D_IN = C_IN * L_IN  # 640  (input per sample, NCL flatten order: c*40 + l)
D_P1 = P1 * C1      # 320  (pool1 activations, position-major: j*16 + c)
D_P2 = P2 * C2      # 320  (pool2 activations, position-major: j*32 + c)

HALF1 = 384         # D_P1 padded to a 128-lane multiple (even/odd halves of conv1 out)
HALF2 = 384         # D_P2 padded to a 128-lane multiple (even/odd halves of conv2 out)


def _round_up(a, m):
    return (a + m - 1) // m * m


# ---------------------------------------------------------------------------
# Kernel: whole forward pass for a block of TB samples, four bf16 matmuls.
# ---------------------------------------------------------------------------
def cnn_kernel(x_ref, w1_ref, b1_ref, w2_ref, b2_ref, w3_ref, b3_ref,
               w4_ref, b4_ref, o_ref):
    x = x_ref[...].astype(jnp.bfloat16)                               # (TB, 640)

    # Conv1(16->16,k5,p2)+ReLU+MaxPool(2): one matmul, even half = cols [0:384),
    # odd half = cols [384:768); both halves zero in their padded tail lanes.
    m1 = jnp.dot(x, w1_ref[...], preferred_element_type=jnp.float32)  # (TB, 768) f32
    p1 = jnp.maximum(jnp.maximum(m1[:, :HALF1], m1[:, HALF1:]) + b1_ref[...],
                     0.0)                                             # (TB, 384)

    # Conv2(16->32,k5,p2)+ReLU+MaxPool(2): same trick (pad rows of w2 are zero).
    m2 = jnp.dot(p1.astype(jnp.bfloat16), w2_ref[...],
                 preferred_element_type=jnp.float32)                  # (TB, 768) f32
    p2 = jnp.maximum(jnp.maximum(m2[:, :HALF2], m2[:, HALF2:]) + b2_ref[...],
                     0.0)                                             # (TB, 384)

    # Flatten + Linear(320, 64) + ReLU (pad rows of w3 are zero).
    h3 = jnp.maximum(
        jnp.dot(p2.astype(jnp.bfloat16), w3_ref[...],
                preferred_element_type=jnp.float32) + b3_ref[...],
        0.0)                                                          # (TB, 64)

    # Linear(64, 9) into a lane-dense padded block (TB, 128), f32 output.
    o_ref[...] = (jnp.dot(h3.astype(jnp.bfloat16), w4_ref[...],
                          preferred_element_type=jnp.float32)
                  + b4_ref[...])


# ---------------------------------------------------------------------------
# One-time parameter preprocessing (PyTorch layouts -> lane-major matrices).
# ---------------------------------------------------------------------------
def _pool_conv_structure(l_in, p_out, parity):
    """S[k, l, j] = 1 iff conv output position (2*j + parity) reads input row l with tap k."""
    s = np.zeros((K, l_in, p_out), np.float32)
    for k in range(K):
        for j in range(p_out):
            l = 2 * j + parity + k - PAD
            if 0 <= l < l_in:
                s[k, l, j] = 1.0
    return jnp.asarray(s)


def prepare_params(pt_params, mm_dtype=jnp.bfloat16):
    """PyTorch-convention params -> block-banded bf16 matrices consumed by the kernel."""
    w1, b1, w2, b2, w3, b3, w4, b4 = pt_params   # w1:(16,16,5) w2:(32,16,5) w3:(64,320) w4:(9,64)

    # Conv1: rows = c_in*L_IN + l (matches x.reshape(B, C_IN*L_IN) of NCL input),
    #        cols = j*C1 + c_out  (position-major pooled activations).
    s1e = _pool_conv_structure(L_IN, P1, 0)
    s1o = _pool_conv_structure(L_IN, P1, 1)
    w1e = jnp.einsum('klj,oik->iljo', s1e, w1).reshape(D_IN, D_P1)
    w1o = jnp.einsum('klj,oik->iljo', s1o, w1).reshape(D_IN, D_P1)
    w1eo = (jnp.zeros((D_IN, 2 * HALF1), jnp.float32)
            .at[:, :D_P1].set(w1e)
            .at[:, HALF1:HALF1 + D_P1].set(w1o))
    b1p = jnp.zeros((1, HALF1), jnp.float32).at[:, :D_P1].set(jnp.tile(b1, P1))

    # Conv2: rows = p*C1 + c_in (position-major p1), cols = j*C2 + c_out.
    # Rows [D_P1:HALF1) are zero -> padded p1 lanes contribute nothing.
    s2e = _pool_conv_structure(P1, P2, 0)
    s2o = _pool_conv_structure(P1, P2, 1)
    w2e = jnp.einsum('kpj,oik->pijo', s2e, w2).reshape(D_P1, D_P2)
    w2o = jnp.einsum('kpj,oik->pijo', s2o, w2).reshape(D_P1, D_P2)
    w2eo = (jnp.zeros((HALF1, 2 * HALF2), jnp.float32)
            .at[:D_P1, :D_P2].set(w2e)
            .at[:D_P1, HALF2:HALF2 + D_P2].set(w2o))
    b2p = jnp.zeros((1, HALF2), jnp.float32).at[:, :D_P2].set(jnp.tile(b2, P2))

    # PyTorch Flatten of (B, C2, P2) is channel-major (c*P2 + j); our activations are
    # position-major (j*C2 + c) -> permute fc1 weight; pad rows to HALF2 with zeros.
    w3m = jnp.transpose(w3.reshape(HID, C2, P2), (2, 1, 0)).reshape(D_P2, HID)
    w3p = jnp.zeros((HALF2, HID), jnp.float32).at[:D_P2, :].set(w3m)
    b3m = b3.reshape(1, HID)

    # fc2: pad the 9 output lanes up to 128 for unmasked lane-dense stores.
    w4p = jnp.zeros((HID, OUT_PAD), jnp.float32).at[:, :OUT].set(w4.T)
    b4p = jnp.zeros((1, OUT_PAD), jnp.float32).at[:, :OUT].set(b4)

    # Matmul weights in bf16 (f32 accumulate in-kernel); biases stay f32.
    return (w1eo.astype(mm_dtype), b1p,
            w2eo.astype(mm_dtype), b2p,
            w3p.astype(mm_dtype), b3m,
            w4p.astype(mm_dtype), b4p)


# ---------------------------------------------------------------------------
# Wrapper
# ---------------------------------------------------------------------------
def cnn_forward(x_ncl, kparams, tb_max=512):
    """x_ncl: (B, C_IN, L_IN) float32 in PyTorch NCL convention. Returns (B, OUT) f32."""
    B = x_ncl.shape[0]
    # Cap TB at ~ceil(B/2) (rounded to the 8-sublane granule) so the "parallel"
    # batch grid has >= 2 steps and both v7x TensorCores get work (harmless on
    # single-TC v5e/v6e).
    tb_half = max(8, _round_up((B + 1) // 2, 8))
    TB = min(tb_max, _round_up(B, 8), tb_half)
    B_pad = _round_up(B, TB)

    x_flat = x_ncl.reshape(B, D_IN).astype(jnp.float32)   # free reshape, no transpose
    if B_pad != B:
        x_flat = jnp.pad(x_flat, ((0, B_pad - B), (0, 0)))

    w1eo, b1p, w2eo, b2p, w3p, b3m, w4p, b4p = kparams

    out = pl.pallas_call(
        cnn_kernel,
        out_shape=jax.ShapeDtypeStruct((B_pad, OUT_PAD), jnp.float32),
        grid=(B_pad // TB,),
        in_specs=[
            pl.BlockSpec((TB, D_IN), lambda b: (b, 0)),          # x block
            pl.BlockSpec((D_IN, 2 * HALF1), lambda b: (0, 0)),   # conv1+pool [even|odd] bf16
            pl.BlockSpec((1, HALF1), lambda b: (0, 0)),          # b1 (tiled per position, padded)
            pl.BlockSpec((HALF1, 2 * HALF2), lambda b: (0, 0)),  # conv2+pool [even|odd] bf16
            pl.BlockSpec((1, HALF2), lambda b: (0, 0)),          # b2 (tiled per position, padded)
            pl.BlockSpec((HALF2, HID), lambda b: (0, 0)),        # fc1 weight bf16 (pad rows zero)
            pl.BlockSpec((1, HID), lambda b: (0, 0)),            # fc1 bias
            pl.BlockSpec((HID, OUT_PAD), lambda b: (0, 0)),      # fc2 weight bf16 (lane-padded)
            pl.BlockSpec((1, OUT_PAD), lambda b: (0, 0)),        # fc2 bias (lane-padded)
        ],
        out_specs=pl.BlockSpec((TB, OUT_PAD), lambda b: (b, 0)),
        compiler_params=pltpu.CompilerParams(
            dimension_semantics=("parallel",),
            vmem_limit_bytes=32 * 1024 * 1024),
    )(x_flat, w1eo, b1p, w2eo, b2p, w3p, b3m, w4p, b4p)

    return out[:B, :OUT]


# ---------------------------------------------------------------------------
# Deterministic synthetic params (PyTorch conventions) + pure-JAX f32 reference.
# ---------------------------------------------------------------------------
def init_pt_params(key):
    ks = jax.random.split(key, 8)
    u = lambda k, shape: jax.random.uniform(k, shape, jnp.float32, -0.1, 0.1)
    w1 = u(ks[0], (C1, C_IN, K)); b1 = u(ks[1], (C1,))
    w2 = u(ks[2], (C2, C1, K));   b2 = u(ks[3], (C2,))
    w3 = u(ks[4], (HID, C2 * P2)); b3 = u(ks[5], (HID,))
    w4 = u(ks[6], (OUT, HID));     b4 = u(ks[7], (OUT,))
    return (w1, b1, w2, b2, w3, b3, w4, b4)


def ref_forward(x_ncl, pt_params):
    """Pure-JAX reference with PyTorch semantics (NCL conv, channel-major flatten)."""
    w1, b1, w2, b2, w3, b3, w4, b4 = pt_params
    x = jnp.transpose(x_ncl, (0, 2, 1)).astype(jnp.float32)          # (B, L, C)
    B = x.shape[0]
    xp = jnp.pad(x, ((0, 0), (2, 2), (0, 0)))
    w1_l = jnp.transpose(w1, (2, 1, 0))                              # (K, Cin, Cout)
    h1 = sum(jnp.einsum('blc,cd->bld', xp[:, k:k + L_IN, :], w1_l[k]) for k in range(K)) + b1
    h1 = jax.nn.relu(h1)
    p1 = jnp.max(h1.reshape(B, P1, 2, C1), axis=2)
    pp = jnp.pad(p1, ((0, 0), (2, 2), (0, 0)))
    w2_l = jnp.transpose(w2, (2, 1, 0))
    h2 = sum(jnp.einsum('blc,cd->bld', pp[:, k:k + P1, :], w2_l[k]) for k in range(K)) + b2
    h2 = jax.nn.relu(h2)
    p2 = jnp.max(h2.reshape(B, P2, 2, C2), axis=2)                   # (B, P2, C2)
    flat = jnp.transpose(p2, (0, 2, 1)).reshape(B, C2 * P2)          # PyTorch flatten order
    h3 = jax.nn.relu(flat @ w3.T + b3)
    return h3 @ w4.T + b4


if __name__ == "__main__":
    key = jax.random.PRNGKey(0)
    kx, kp, kx2 = jax.random.split(key, 3)
    pt_params = init_pt_params(kp)
    kparams = prepare_params(pt_params)

    # bf16 matmul operands with f32 accumulation -> loosen tolerance vs f32 reference.
    RTOL, ATOL = 3e-2, 3e-2

    # Small test at the module's natural shapes (PyTorch NCL input).
    x = jax.random.normal(kx, (2, C_IN, L_IN), dtype=jnp.float32)
    fwd = jax.jit(cnn_forward)
    out = jax.block_until_ready(fwd(x, kparams))
    ref = ref_forward(x, pt_params)
    assert out.shape == (2, OUT), out.shape
    if not jnp.allclose(out, ref, rtol=RTOL, atol=ATOL):
        raise AssertionError(
            f"Pallas kernel output does not match reference (B=2), "
            f"max abs err {float(jnp.max(jnp.abs(out - ref)))}")

    # Exercise a multi-step grid + batch padding (B=67 -> TB=32, 3 grid steps).
    x2 = jax.random.normal(kx2, (67, C_IN, L_IN), dtype=jnp.float32)
    out2 = jax.block_until_ready(cnn_forward(x2, kparams, tb_max=32))
    ref2 = ref_forward(x2, pt_params)
    assert out2.shape == (67, OUT), out2.shape
    if not jnp.allclose(out2, ref2, rtol=RTOL, atol=ATOL):
        raise AssertionError(
            f"Pallas kernel output does not match reference (B=67), "
            f"max abs err {float(jnp.max(jnp.abs(out2 - ref2)))}")

    print("KERNEL_OK")
</pallas_src>

<mosaic_0001>
module attributes {stable_mosaic.version = 11 : i64} {
  func.func @cnn_kernel(%arg0: i32, %arg1: memref<8x640xf32, #tpu.memory_space<vmem>>, %arg2: memref<640x768xbf16, #tpu.memory_space<vmem>>, %arg3: memref<1x384xf32, #tpu.memory_space<vmem>>, %arg4: memref<384x768xbf16, #tpu.memory_space<vmem>>, %arg5: memref<1x384xf32, #tpu.memory_space<vmem>>, %arg6: memref<384x64xbf16, #tpu.memory_space<vmem>>, %arg7: memref<1x64xf32, #tpu.memory_space<vmem>>, %arg8: memref<64x128xbf16, #tpu.memory_space<vmem>>, %arg9: memref<1x128xf32, #tpu.memory_space<vmem>>, %arg10: memref<8x128xf32, #tpu.memory_space<vmem>>) attributes {dimension_semantics = [#tpu.dimension_semantics<parallel>], iteration_bounds = array<i64: 1>, scalar_prefetch = 0 : i64, scratch_operands = 0 : i64, tpu.core_type = #tpu.core_type<tc>, window_params = [{transform_indices = @transform_0, window_bounds = array<i64: 8, 640>}, {pipeline_mode = #tpu.pipeline_mode<synchronous>, transform_indices = @transform_1, window_bounds = array<i64: 640, 768>}, {pipeline_mode = #tpu.pipeline_mode<synchronous>, transform_indices = @transform_2, window_bounds = array<i64: 1, 384>}, {pipeline_mode = #tpu.pipeline_mode<synchronous>, transform_indices = @transform_3, window_bounds = array<i64: 384, 768>}, {pipeline_mode = #tpu.pipeline_mode<synchronous>, transform_indices = @transform_4, window_bounds = array<i64: 1, 384>}, {pipeline_mode = #tpu.pipeline_mode<synchronous>, transform_indices = @transform_5, window_bounds = array<i64: 384, 64>}, {pipeline_mode = #tpu.pipeline_mode<synchronous>, transform_indices = @transform_6, window_bounds = array<i64: 1, 64>}, {pipeline_mode = #tpu.pipeline_mode<synchronous>, transform_indices = @transform_7, window_bounds = array<i64: 64, 128>}, {pipeline_mode = #tpu.pipeline_mode<synchronous>, transform_indices = @transform_8, window_bounds = array<i64: 1, 128>}, {transform_indices = @transform_9, window_bounds = array<i64: 8, 128>}]} {
    %c0 = arith.constant 0 : index
    %c0_0 = arith.constant 0 : index
    %0 = vector.load %arg1[%c0, %c0_0] : memref<8x640xf32, #tpu.memory_space<vmem>>, vector<8x640xf32>
    %1 = arith.truncf %0 : vector<8x640xf32> to vector<8x640xbf16>
    %c0_1 = arith.constant 0 : index
    %c0_2 = arith.constant 0 : index
    %2 = vector.load %arg2[%c0_1, %c0_2] : memref<640x768xbf16, #tpu.memory_space<vmem>>, vector<640x768xbf16>
    %cst = arith.constant dense<0.000000e+00> : vector<8x768xf32>
    %3 = tpu.matmul %1, %2, %cst {dimension_numbers = #tpu.dot_dimension_numbers<[1], [0], [0], [1], [0, 0, 1, 1], [], []>} : vector<8x640xbf16>, vector<640x768xbf16>, vector<8x768xf32> -> vector<8x768xf32>
    %4 = vector.extract_strided_slice %3 {offsets = [0, 0], sizes = [8, 384], strides = [1, 1]} : vector<8x768xf32> to vector<8x384xf32>
    %5 = vector.extract_strided_slice %3 {offsets = [0, 384], sizes = [8, 384], strides = [1, 1]} : vector<8x768xf32> to vector<8x384xf32>
    %6 = arith.maximumf %4, %5 : vector<8x384xf32>
    %c0_3 = arith.constant 0 : index
    %c0_4 = arith.constant 0 : index
    %7 = vector.load %arg3[%c0_3, %c0_4] : memref<1x384xf32, #tpu.memory_space<vmem>>, vector<1x384xf32>
    %8 = vector.broadcast %7 : vector<1x384xf32> to vector<8x384xf32>
    %9 = arith.addf %6, %8 : vector<8x384xf32>
    %cst_5 = arith.constant 0.000000e+00 : f32
    %10 = vector.broadcast %cst_5 : f32 to vector<8x384xf32>
    %11 = arith.maximumf %9, %10 : vector<8x384xf32>
    %12 = arith.truncf %11 : vector<8x384xf32> to vector<8x384xbf16>
    %c0_6 = arith.constant 0 : index
    %c0_7 = arith.constant 0 : index
    %13 = vector.load %arg4[%c0_6, %c0_7] : memref<384x768xbf16, #tpu.memory_space<vmem>>, vector<384x768xbf16>
    %cst_8 = arith.constant dense<0.000000e+00> : vector<8x768xf32>
    %14 = tpu.matmul %12, %13, %cst_8 {dimension_numbers = #tpu.dot_dimension_numbers<[1], [0], [0], [1], [0, 0, 1, 1], [], []>} : vector<8x384xbf16>, vector<384x768xbf16>, vector<8x768xf32> -> vector<8x768xf32>
    %15 = vector.extract_strided_slice %14 {offsets = [0, 0], sizes = [8, 384], strides = [1, 1]} : vector<8x768xf32> to vector<8x384xf32>
    %16 = vector.extract_strided_slice %14 {offsets = [0, 384], sizes = [8, 384], strides = [1, 1]} : vector<8x768xf32> to vector<8x384xf32>
    %17 = arith.maximumf %15, %16 : vector<8x384xf32>
    %c0_9 = arith.constant 0 : index
    %c0_10 = arith.constant 0 : index
    %18 = vector.load %arg5[%c0_9, %c0_10] : memref<1x384xf32, #tpu.memory_space<vmem>>, vector<1x384xf32>
    %19 = vector.broadcast %18 : vector<1x384xf32> to vector<8x384xf32>
    %20 = arith.addf %17, %19 : vector<8x384xf32>
    %cst_11 = arith.constant 0.000000e+00 : f32
    %21 = vector.broadcast %cst_11 : f32 to vector<8x384xf32>
    %22 = arith.maximumf %20, %21 : vector<8x384xf32>
    %23 = arith.truncf %22 : vector<8x384xf32> to vector<8x384xbf16>
    %c0_12 = arith.constant 0 : index
    %c0_13 = arith.constant 0 : index
    %24 = vector.load %arg6[%c0_12, %c0_13] : memref<384x64xbf16, #tpu.memory_space<vmem>>, vector<384x64xbf16>
    %cst_14 = arith.constant dense<0.000000e+00> : vector<8x64xf32>
    %25 = tpu.matmul %23, %24, %cst_14 {dimension_numbers = #tpu.dot_dimension_numbers<[1], [0], [0], [1], [0, 0, 1, 1], [], []>} : vector<8x384xbf16>, vector<384x64xbf16>, vector<8x64xf32> -> vector<8x64xf32>
    %c0_15 = arith.constant 0 : index
    %c0_16 = arith.constant 0 : index
    %26 = vector.load %arg7[%c0_15, %c0_16] : memref<1x64xf32, #tpu.memory_space<vmem>>, vector<1x64xf32>
    %27 = vector.broadcast %26 : vector<1x64xf32> to vector<8x64xf32>
    %28 = arith.addf %25, %27 : vector<8x64xf32>
    %cst_17 = arith.constant 0.000000e+00 : f32
    %29 = vector.broadcast %cst_17 : f32 to vector<8x64xf32>
    %30 = arith.maximumf %28, %29 : vector<8x64xf32>
    %31 = arith.truncf %30 : vector<8x64xf32> to vector<8x64xbf16>
    %c0_18 = arith.constant 0 : index
    %c0_19 = arith.constant 0 : index
    %32 = vector.load %arg8[%c0_18, %c0_19] : memref<64x128xbf16, #tpu.memory_space<vmem>>, vector<64x128xbf16>
    %cst_20 = arith.constant dense<0.000000e+00> : vector<8x128xf32>
    %33 = tpu.matmul %31, %32, %cst_20 {dimension_numbers = #tpu.dot_dimension_numbers<[1], [0], [0], [1], [0, 0, 1, 1], [], []>} : vector<8x64xbf16>, vector<64x128xbf16>, vector<8x128xf32> -> vector<8x128xf32>
    %c0_21 = arith.constant 0 : index
    %c0_22 = arith.constant 0 : index
    %34 = vector.load %arg9[%c0_21, %c0_22] : memref<1x128xf32, #tpu.memory_space<vmem>>, vector<1x128xf32>
    %35 = vector.broadcast %34 : vector<1x128xf32> to vector<8x128xf32>
    %36 = arith.addf %33, %35 : vector<8x128xf32>
    %c0_23 = arith.constant 0 : index
    %c0_24 = arith.constant 0 : index
    %37 = vector.load %arg10[%c0_23, %c0_24] : memref<8x128xf32, #tpu.memory_space<vmem>>, vector<8x128xf32>
    tpu.vector_store %arg10[%c0_23, %c0_24], %36 {strides = array<i32>} : memref<8x128xf32, #tpu.memory_space<vmem>>, vector<8x128xf32>,
    return
  }
  func.func @transform_0(%arg0: i32) -> (i32, i32) {
    %c0_i32 = arith.constant 0 : i32
    %c0_i32_0 = arith.constant 0 : i32
    return %arg0, %c0_i32 : i32, i32
  }
  func.func @transform_1(%arg0: i32) -> (i32, i32) {
    %c0_i32 = arith.constant 0 : i32
    %c0_i32_0 = arith.constant 0 : i32
    %c0_i32_1 = arith.constant 0 : i32
    return %c0_i32, %c0_i32_0 : i32, i32
  }
  func.func @transform_2(%arg0: i32) -> (i32, i32) {
    %c0_i32 = arith.constant 0 : i32
    %c0_i32_0 = arith.constant 0 : i32
    %c0_i32_1 = arith.constant 0 : i32
    return %c0_i32, %c0_i32_0 : i32, i32
  }
  func.func @transform_3(%arg0: i32) -> (i32, i32) {
    %c0_i32 = arith.constant 0 : i32
    %c0_i32_0 = arith.constant 0 : i32
    %c0_i32_1 = arith.constant 0 : i32
    return %c0_i32, %c0_i32_0 : i32, i32
  }
  func.func @transform_4(%arg0: i32) -> (i32, i32) {
    %c0_i32 = arith.constant 0 : i32
    %c0_i32_0 = arith.constant 0 : i32
    %c0_i32_1 = arith.constant 0 : i32
    return %c0_i32, %c0_i32_0 : i32, i32
  }
  func.func @transform_5(%arg0: i32) -> (i32, i32) {
    %c0_i32 = arith.constant 0 : i32
    %c0_i32_0 = arith.constant 0 : i32
    %c0_i32_1 = arith.constant 0 : i32
    return %c0_i32, %c0_i32_0 : i32, i32
  }
  func.func @transform_6(%arg0: i32) -> (i32, i32) {
    %c0_i32 = arith.constant 0 : i32
    %c0_i32_0 = arith.constant 0 : i32
    %c0_i32_1 = arith.constant 0 : i32
    return %c0_i32, %c0_i32_0 : i32, i32
  }
  func.func @transform_7(%arg0: i32) -> (i32, i32) {
    %c0_i32 = arith.constant 0 : i32
    %c0_i32_0 = arith.constant 0 : i32
    %c0_i32_1 = arith.constant 0 : i32
    return %c0_i32, %c0_i32_0 : i32, i32
  }
  func.func @transform_8(%arg0: i32) -> (i32, i32) {
    %c0_i32 = arith.constant 0 : i32
    %c0_i32_0 = arith.constant 0 : i32
    %c0_i32_1 = arith.constant 0 : i32
    return %c0_i32, %c0_i32_0 : i32, i32
  }
  func.func @transform_9(%arg0: i32) -> (i32, i32) {
    %c0_i32 = arith.constant 0 : i32
    %c0_i32_0 = arith.constant 0 : i32
    return %arg0, %c0_i32 : i32, i32
  }
}

</mosaic_0001>

<llo_original>
// kernel: cnn_forward.1
$region0: #{cnn_forward.1}
  #allocation0 [shape = 'u32[]', space=smem, size = 0x4, offset = 0x4, fixed_abs, tag = 'smem constant byte address 0x4 - core index']
  #allocation1 [shape = 'u32[144,128]{1,0:T(1,128)}', space=vmem, size = 0x12000, scoped, tag = 'internal scratch']
  %s0 = inlined_call_operand.vmem [shape: f32[8,640], index: 0, kind: input, shape index: {}]
  %s1 = inlined_call_operand.hbm [shape: bf16[640,768], index: 1, kind: input, shape index: {}]
  %s2 = inlined_call_operand.vmem [shape: f32[1,384], index: 2, kind: input, shape index: {}]
  %s3 = inlined_call_operand.hbm [shape: bf16[384,768], index: 3, kind: input, shape index: {}]
  %s4 = inlined_call_operand.vmem [shape: f32[1,384], index: 4, kind: input, shape index: {}]
  %s5 = inlined_call_operand.vmem [shape: bf16[384,64], index: 5, kind: input, shape index: {}]
  %s6 = inlined_call_operand.vmem [shape: f32[1,64], index: 6, kind: input, shape index: {}]
  %s7 = inlined_call_operand.vmem [shape: bf16[64,128], index: 7, kind: input, shape index: {}]
  %s8 = inlined_call_operand.vmem [shape: f32[1,128], index: 8, kind: input, shape index: {}]
  %s9 = inlined_call_operand.vmem [shape: f32[8,128], index: 9, kind: output, shape index: {}]
  %s10 = sld [smem:[#allocation0]]
  $region54: #{cnn_forward.1} parent=0
    _
  %s12 = ssub.s32 1, %s10
  %s13 = scalar_select 0, %s12, %s10
  $region1: #{cnn_forward.1} parent=0
    #allocation2 [shape = 'u8[983040]{0}', space=vmem, size = 0xf0000, scoped, tag = 'input window, operand 1, single buffered']
    #allocation3 [shape = 's32[1]{0}', space=sflag, size = 0x4, scoped, tag = 'scoped memory for cnn_forward.1']
    #allocation4 [shape = 'u8[589824]{0}', space=vmem, size = 0x90000, scoped, tag = 'input window, operand 3, single buffered']
    #allocation5 [shape = 's32[1]{0}', space=sflag, size = 0x4, scoped, tag = 'scoped memory for cnn_forward.1']
    %14 = vsyncpa [#allocation3], 0
    %15 = vsyncpa [#allocation5], 0
    // Predicated region
    $region2: #{cnn_forward.1} parent=1 // pred_check
      _
    $region3: #{cnn_forward.1} parent=1 // pred_check_branch
      %17 = sbr.rel (0) target = $region5
    $region4: #{cnn_forward.1} parent=1 // pred_region
      _
    $region5: #{cnn_forward.1} parent=1 // pred_fallthru
      _
    // Predicated region
    $region6: #{cnn_forward.1} parent=1 // pred_check
      _
    $region7: #{cnn_forward.1} parent=1 // pred_check_branch
      %19 = sbr.rel (0) target = $region9
    $region8: #{cnn_forward.1} parent=1 // pred_region
      %s21 = ssub.s32 30720, 30720
      %22 = vsyncadd [#allocation3], %s21
      %s23 = sshll.u32 [#allocation2], 4
      %s24 = int_to_ptr.vmem [resolvable:$true] %s23
      %29 = dma.hbm_to_vmem [thread:$0]  %s1, 30720, %s24, [#allocation3], 384, 384, 24
    $region9: #{cnn_forward.1} parent=1 // pred_fallthru
      _
    // Predicated region
    $region10: #{cnn_forward.1} parent=1 // pred_check
      _
    $region11: #{cnn_forward.1} parent=1 // pred_check_branch
      %31 = sbr.rel (0) target = $region13
    $region12: #{cnn_forward.1} parent=1 // pred_region
      _
    $region13: #{cnn_forward.1} parent=1 // pred_fallthru
      _
    // Predicated region
    $region14: #{cnn_forward.1} parent=1 // pred_check
      _
    $region15: #{cnn_forward.1} parent=1 // pred_check_branch
      %33 = sbr.rel (0) target = $region17
    $region16: #{cnn_forward.1} parent=1 // pred_region
      %s35 = ssub.s32 18432, 18432
      %36 = vsyncadd [#allocation5], %s35
      %s37 = sshll.u32 [#allocation4], 4
      %s38 = int_to_ptr.vmem [resolvable:$true] %s37
      %43 = dma.hbm_to_vmem [thread:$0]  %s3, 18432, %s38, [#allocation5], 384, 384, 24
    $region17: #{cnn_forward.1} parent=1 // pred_fallthru
      _
    // Predicated region
    $region18: #{cnn_forward.1} parent=1 // pred_check
      _
    $region19: #{cnn_forward.1} parent=1 // pred_check_branch
      %45 = sbr.rel (0) target = $region21
    $region20: #{cnn_forward.1} parent=1 // pred_region
      _
    $region21: #{cnn_forward.1} parent=1 // pred_fallthru
      _
    // Predicated region
    $region22: #{cnn_forward.1} parent=1 // pred_check
      _
    $region23: #{cnn_forward.1} parent=1 // pred_check_branch
      %47 = sbr.rel (0) target = $region25
    $region24: #{cnn_forward.1} parent=1 // pred_region
      _
    $region25: #{cnn_forward.1} parent=1 // pred_fallthru
      _
    // Predicated region
    $region26: #{cnn_forward.1} parent=1 // pred_check
      _
    $region27: #{cnn_forward.1} parent=1 // pred_check_branch
      %49 = sbr.rel (0) target = $region29
    $region28: #{cnn_forward.1} parent=1 // pred_region
      _
    $region29: #{cnn_forward.1} parent=1 // pred_fallthru
      _
    // Predicated region
    $region30: #{cnn_forward.1} parent=1 // pred_check
      _
    $region31: #{cnn_forward.1} parent=1 // pred_check_branch
      %51 = sbr.rel (0) target = $region33
    $region32: #{cnn_forward.1} parent=1 // pred_region
      _
    $region33: #{cnn_forward.1} parent=1 // pred_fallthru
      _
    // Predicated region
    $region34: #{cnn_forward.1} parent=1 // pred_check
      _
    $region35: #{cnn_forward.1} parent=1 // pred_check_branch
      %53 = sbr.rel (0) target = $region37
    $region36: #{cnn_forward.1} parent=1 // pred_region
      _
    $region37: #{cnn_forward.1} parent=1 // pred_fallthru
      _
    // Predicated region
    $region38: #{cnn_forward.1} parent=1 // pred_check
      _
    $region39: #{cnn_forward.1} parent=1 // pred_check_branch
      %55 = sbr.rel (0) target = $region41
    $region40: #{cnn_forward.1} parent=1 // pred_region
      %56 = dma.done [#allocation3], 30720
    $region41: #{cnn_forward.1} parent=1 // pred_fallthru
      _
    // Predicated region
    $region42: #{cnn_forward.1} parent=1 // pred_check
      _
    $region43: #{cnn_forward.1} parent=1 // pred_check_branch
      %58 = sbr.rel (0) target = $region45
    $region44: #{cnn_forward.1} parent=1 // pred_region
      %59 = dma.done [#allocation5], 18432
    $region45: #{cnn_forward.1} parent=1 // pred_fallthru
      _
    %v61 = vld [vmem:[%s0] sm:$0xff]
    %v62 = vld [vmem:[%s0 + $0x8] sm:$0xff]
    %v63 = vld [vmem:[%s0 + $0x10] sm:$0xff]
    %v64 = vld [vmem:[%s0 + $0x18] sm:$0xff]
    %v65 = vld [vmem:[%s0 + $0x20] sm:$0xff]
    %v66 = vpack.c.bf16 %v61, %v61
    %v67 = vpack.c.bf16 %v62, %v62
    %v68 = vpack.c.bf16 %v63, %v63
    %v69 = vpack.c.bf16 %v64, %v64
    %v70 = vpack.c.bf16 %v65, %v65
    %v71 = vld [vmem:[#allocation2] sm:$0xff]
    %v72 = vld [vmem:[#allocation2 + $0x8] sm:$0xff]
    %v73 = vld [vmem:[#allocation2 + $0x10] sm:$0xff]
    %v74 = vld [vmem:[#allocation2 + $0x18] sm:$0xff]
    %v75 = vld [vmem:[#allocation2 + $0x20] sm:$0xff]
    %v76 = vld [vmem:[#allocation2 + $0x28] sm:$0xff]
    %v77 = vld [vmem:[#allocation2 + $0x30] sm:$0xff]
    %v78 = vld [vmem:[#allocation2 + $0x38] sm:$0xff]
    %v79 = vld [vmem:[#allocation2 + $0x40] sm:$0xff]
    %v80 = vld [vmem:[#allocation2 + $0x48] sm:$0xff]
    %v81 = vld [vmem:[#allocation2 + $0x50] sm:$0xff]
    %v82 = vld [vmem:[#allocation2 + $0x58] sm:$0xff]
    %v83 = vld [vmem:[#allocation2 + $0x60] sm:$0xff]
    %v84 = vld [vmem:[#allocation2 + $0x68] sm:$0xff]
    %v85 = vld [vmem:[#allocation2 + $0x70] sm:$0xff]
    %v86 = vld [vmem:[#allocation2 + $0x78] sm:$0xff]
    %v87 = vld [vmem:[#allocation2 + $0x80] sm:$0xff]
    %v88 = vld [vmem:[#allocation2 + $0x88] sm:$0xff]
    %v89 = vld [vmem:[#allocation2 + $0x90] sm:$0xff]
    %v90 = vld [vmem:[#allocation2 + $0x98] sm:$0xff]
    %v91 = vld [vmem:[#allocation2 + $0xa0] sm:$0xff]
    %v92 = vld [vmem:[#allocation2 + $0xa8] sm:$0xff]
    %v93 = vld [vmem:[#allocation2 + $0xb0] sm:$0xff]
    %v94 = vld [vmem:[#allocation2 + $0xb8] sm:$0xff]
    %v95 = vld [vmem:[#allocation2 + $0xc0] sm:$0xff]
    %v96 = vld [vmem:[#allocation2 + $0xc8] sm:$0xff]
    %v97 = vld [vmem:[#allocation2 + $0xd0] sm:$0xff]
    %v98 = vld [vmem:[#allocation2 + $0xd8] sm:$0xff]
    %v99 = vld [vmem:[#allocation2 + $0xe0] sm:$0xff]
    %v100 = vld [vmem:[#allocation2 + $0xe8] sm:$0xff]
    %v101 = vld [vmem:[#allocation2 + $0xf0] sm:$0xff]
    %v102 = vld [vmem:[#allocation2 + $0xf8] sm:$0xff]
    %v103 = vld [vmem:[#allocation2 + $0x100] sm:$0xff]
    %v104 = vld [vmem:[#allocation2 + $0x108] sm:$0xff]
    %v105 = vld [vmem:[#allocation2 + $0x110] sm:$0xff]
    %v106 = vld [vmem:[#allocation2 + $0x118] sm:$0xff]
    %v107 = vld [vmem:[#allocation2 + $0x120] sm:$0xff]
    %v108 = vld [vmem:[#allocation2 + $0x128] sm:$0xff]
    %v109 = vld [vmem:[#allocation2 + $0x130] sm:$0xff]
    %v110 = vld [vmem:[#allocation2 + $0x138] sm:$0xff]
    %v111 = vld [vmem:[#allocation2 + $0x140] sm:$0xff]
    %v112 = vld [vmem:[#allocation2 + $0x148] sm:$0xff]
    %v113 = vld [vmem:[#allocation2 + $0x150] sm:$0xff]
    %v114 = vld [vmem:[#allocation2 + $0x158] sm:$0xff]
    %v115 = vld [vmem:[#allocation2 + $0x160] sm:$0xff]
    %v116 = vld [vmem:[#allocation2 + $0x168] sm:$0xff]
    %v117 = vld [vmem:[#allocation2 + $0x170] sm:$0xff]
    %v118 = vld [vmem:[#allocation2 + $0x178] sm:$0xff]
    %v119 = vld [vmem:[#allocation2 + $0x180] sm:$0xff]
    %v120 = vld [vmem:[#allocation2 + $0x188] sm:$0xff]
    %v121 = vld [vmem:[#allocation2 + $0x190] sm:$0xff]
    %v122 = vld [vmem:[#allocation2 + $0x198] sm:$0xff]
    %v123 = vld [vmem:[#allocation2 + $0x1a0] sm:$0xff]
    %v124 = vld [vmem:[#allocation2 + $0x1a8] sm:$0xff]
    %v125 = vld [vmem:[#allocation2 + $0x1b0] sm:$0xff]
    %v126 = vld [vmem:[#allocation2 + $0x1b8] sm:$0xff]
    %v127 = vld [vmem:[#allocation2 + $0x1c0] sm:$0xff]
    %v128 = vld [vmem:[#allocation2 + $0x1c8] sm:$0xff]
    %v129 = vld [vmem:[#allocation2 + $0x1d0] sm:$0xff]
    %v130 = vld [vmem:[#allocation2 + $0x1d8] sm:$0xff]
    %v131 = vld [vmem:[#allocation2 + $0x1e0] sm:$0xff]
    %v132 = vld [vmem:[#allocation2 + $0x1e8] sm:$0xff]
    %v133 = vld [vmem:[#allocation2 + $0x1f0] sm:$0xff]
    %v134 = vld [vmem:[#allocation2 + $0x1f8] sm:$0xff]
    %v135 = vld [vmem:[#allocation2 + $0x200] sm:$0xff]
    %v136 = vld [vmem:[#allocation2 + $0x208] sm:$0xff]
    %v137 = vld [vmem:[#allocation2 + $0x210] sm:$0xff]
    %v138 = vld [vmem:[#allocation2 + $0x218] sm:$0xff]
    %v139 = vld [vmem:[#allocation2 + $0x220] sm:$0xff]
    %v140 = vld [vmem:[#allocation2 + $0x228] sm:$0xff]
    %v141 = vld [vmem:[#allocation2 + $0x230] sm:$0xff]
    %v142 = vld [vmem:[#allocation2 + $0x238] sm:$0xff]
    %v143 = vld [vmem:[#allocation2 + $0x240] sm:$0xff]
    %v144 = vld [vmem:[#allocation2 + $0x248] sm:$0xff]
    %v145 = vld [vmem:[#allocation2 + $0x250] sm:$0xff]
    %v146 = vld [vmem:[#allocation2 + $0x258] sm:$0xff]
    %v147 = vld [vmem:[#allocation2 + $0x260] sm:$0xff]
    %v148 = vld [vmem:[#allocation2 + $0x268] sm:$0xff]
    %v149 = vld [vmem:[#allocation2 + $0x270] sm:$0xff]
    %v150 = vld [vmem:[#allocation2 + $0x278] sm:$0xff]
    %v151 = vld [vmem:[#allocation2 + $0x280] sm:$0xff]
    %v152 = vld [vmem:[#allocation2 + $0x288] sm:$0xff]
    %v153 = vld [vmem:[#allocation2 + $0x290] sm:$0xff]
    %v154 = vld [vmem:[#allocation2 + $0x298] sm:$0xff]
    %v155 = vld [vmem:[#allocation2 + $0x2a0] sm:$0xff]
    %v156 = vld [vmem:[#allocation2 + $0x2a8] sm:$0xff]
    %v157 = vld [vmem:[#allocation2 + $0x2b0] sm:$0xff]
    %v158 = vld [vmem:[#allocation2 + $0x2b8] sm:$0xff]
    %v159 = vld [vmem:[#allocation2 + $0x2c0] sm:$0xff]
    %v160 = vld [vmem:[#allocation2 + $0x2c8] sm:$0xff]
    %v161 = vld [vmem:[#allocation2 + $0x2d0] sm:$0xff]
    %v162 = vld [vmem:[#allocation2 + $0x2d8] sm:$0xff]
    %v163 = vld [vmem:[#allocation2 + $0x2e0] sm:$0xff]
    %v164 = vld [vmem:[#allocation2 + $0x2e8] sm:$0xff]
    %v165 = vld [vmem:[#allocation2 + $0x2f0] sm:$0xff]
    %v166 = vld [vmem:[#allocation2 + $0x2f8] sm:$0xff]
    %v167 = vld [vmem:[#allocation2 + $0x300] sm:$0xff]
    %v168 = vld [vmem:[#allocation2 + $0x308] sm:$0xff]
    %v169 = vld [vmem:[#allocation2 + $0x310] sm:$0xff]
    %v170 = vld [vmem:[#allocation2 + $0x318] sm:$0xff]
    %v171 = vld [vmem:[#allocation2 + $0x320] sm:$0xff]
    %v172 = vld [vmem:[#allocation2 + $0x328] sm:$0xff]
    %v173 = vld [vmem:[#allocation2 + $0x330] sm:$0xff]
    %v174 = vld [vmem:[#allocation2 + $0x338] sm:$0xff]
    %v175 = vld [vmem:[#allocation2 + $0x340] sm:$0xff]
    %v176 = vld [vmem:[#allocation2 + $0x348] sm:$0xff]
    %v177 = vld [vmem:[#allocation2 + $0x350] sm:$0xff]
    %v178 = vld [vmem:[#allocation2 + $0x358] sm:$0xff]
    %v179 = vld [vmem:[#allocation2 + $0x360] sm:$0xff]
    %v180 = vld [vmem:[#allocation2 + $0x368] sm:$0xff]
    %v181 = vld [vmem:[#allocation2 + $0x370] sm:$0xff]
    %v182 = vld [vmem:[#allocation2 + $0x378] sm:$0xff]
    %v183 = vld [vmem:[#allocation2 + $0x380] sm:$0xff]
    %v184 = vld [vmem:[#allocation2 + $0x388] sm:$0xff]
    %v185 = vld [vmem:[#allocation2 + $0x390] sm:$0xff]
    %v186 = vld [vmem:[#allocation2 + $0x398] sm:$0xff]
    %v187 = vld [vmem:[#allocation2 + $0x3a0] sm:$0xff]
    %v188 = vld [vmem:[#allocation2 + $0x3a8] sm:$0xff]
    %v189 = vld [vmem:[#allocation2 + $0x3b0] sm:$0xff]
    %v190 = vld [vmem:[#allocation2 + $0x3b8] sm:$0xff]
    %v191 = vld [vmem:[#allocation2 + $0x3c0] sm:$0xff]
    %v192 = vld [vmem:[#allocation2 + $0x3c8] sm:$0xff]
    %v193 = vld [vmem:[#allocation2 + $0x3d0] sm:$0xff]
    %v194 = vld [vmem:[#allocation2 + $0x3d8] sm:$0xff]
    %v195 = vld [vmem:[#allocation2 + $0x3e0] sm:$0xff]
    %v196 = vld [vmem:[#allocation2 + $0x3e8] sm:$0xff]
    %v197 = vld [vmem:[#allocation2 + $0x3f0] sm:$0xff]
    %v198 = vld [vmem:[#allocation2 + $0x3f8] sm:$0xff]
    %v199 = vld [vmem:[#allocation2 + $0x400] sm:$0xff]
    %v200 = vld [vmem:[#allocation2 + $0x408] sm:$0xff]
    %v201 = vld [vmem:[#allocation2 + $0x410] sm:$0xff]
    %v202 = vld [vmem:[#allocation2 + $0x418] sm:$0xff]
    %v203 = vld [vmem:[#allocation2 + $0x420] sm:$0xff]
    %v204 = vld [vmem:[#allocation2 + $0x428] sm:$0xff]
    %v205 = vld [vmem:[#allocation2 + $0x430] sm:$0xff]
    %v206 = vld [vmem:[#allocation2 + $0x438] sm:$0xff]
    %v207 = vld [vmem:[#allocation2 + $0x440] sm:$0xff]
    %v208 = vld [vmem:[#allocation2 + $0x448] sm:$0xff]
    %v209 = vld [vmem:[#allocation2 + $0x450] sm:$0xff]
    %v210 = vld [vmem:[#allocation2 + $0x458] sm:$0xff]
    %v211 = vld [vmem:[#allocation2 + $0x460] sm:$0xff]
    %v212 = vld [vmem:[#allocation2 + $0x468] sm:$0xff]
    %v213 = vld [vmem:[#allocation2 + $0x470] sm:$0xff]
    %v214 = vld [vmem:[#allocation2 + $0x478] sm:$0xff]
    %v215 = vld [vmem:[#allocation2 + $0x480] sm:$0xff]
    %v216 = vld [vmem:[#allocation2 + $0x488] sm:$0xff]
    %v217 = vld [vmem:[#allocation2 + $0x490] sm:$0xff]
    %v218 = vld [vmem:[#allocation2 + $0x498] sm:$0xff]
    %v219 = vld [vmem:[#allocation2 + $0x4a0] sm:$0xff]
    %v220 = vld [vmem:[#allocation2 + $0x4a8] sm:$0xff]
    %v221 = vld [vmem:[#allocation2 + $0x4b0] sm:$0xff]
    %v222 = vld [vmem:[#allocation2 + $0x4b8] sm:$0xff]
    %v223 = vld [vmem:[#allocation2 + $0x4c0] sm:$0xff]
    %v224 = vld [vmem:[#allocation2 + $0x4c8] sm:$0xff]
    %v225 = vld [vmem:[#allocation2 + $0x4d0] sm:$0xff]
    %v226 = vld [vmem:[#allocation2 + $0x4d8] sm:$0xff]
    %v227 = vld [vmem:[#allocation2 + $0x4e0] sm:$0xff]
    %v228 = vld [vmem:[#allocation2 + $0x4e8] sm:$0xff]
    %v229 = vld [vmem:[#allocation2 + $0x4f0] sm:$0xff]
    %v230 = vld [vmem:[#allocation2 + $0x4f8] sm:$0xff]
    %v231 = vld [vmem:[#allocation2 + $0x500] sm:$0xff]
    %v232 = vld [vmem:[#allocation2 + $0x508] sm:$0xff]
    %v233 = vld [vmem:[#allocation2 + $0x510] sm:$0xff]
    %v234 = vld [vmem:[#allocation2 + $0x518] sm:$0xff]
    %v235 = vld [vmem:[#allocation2 + $0x520] sm:$0xff]
    %v236 = vld [vmem:[#allocation2 + $0x528] sm:$0xff]
    %v237 = vld [vmem:[#allocation2 + $0x530] sm:$0xff]
    %v238 = vld [vmem:[#allocation2 + $0x538] sm:$0xff]
    %v239 = vld [vmem:[#allocation2 + $0x540] sm:$0xff]
    %v240 = vld [vmem:[#allocation2 + $0x548] sm:$0xff]
    %v241 = vld [vmem:[#allocation2 + $0x550] sm:$0xff]
    %v242 = vld [vmem:[#allocation2 + $0x558] sm:$0xff]
    %v243 = vld [vmem:[#allocation2 + $0x560] sm:$0xff]
    %v244 = vld [vmem:[#allocation2 + $0x568] sm:$0xff]
    %v245 = vld [vmem:[#allocation2 + $0x570] sm:$0xff]
    %v246 = vld [vmem:[#allocation2 + $0x578] sm:$0xff]
    %v247 = vld [vmem:[#allocation2 + $0x580] sm:$0xff]
    %v248 = vld [vmem:[#allocation2 + $0x588] sm:$0xff]
    %v249 = vld [vmem:[#allocation2 + $0x590] sm:$0xff]
    %v250 = vld [vmem:[#allocation2 + $0x598] sm:$0xff]
    %v251 = vld [vmem:[#allocation2 + $0x5a0] sm:$0xff]
    %v252 = vld [vmem:[#allocation2 + $0x5a8] sm:$0xff]
    %v253 = vld [vmem:[#allocation2 + $0x5b0] sm:$0xff]
    %v254 = vld [vmem:[#allocation2 + $0x5b8] sm:$0xff]
    %v255 = vld [vmem:[#allocation2 + $0x5c0] sm:$0xff]
    %v256 = vld [vmem:[#allocation2 + $0x5c8] sm:$0xff]
    %v257 = vld [vmem:[#allocation2 + $0x5d0] sm:$0xff]
    %v258 = vld [vmem:[#allocation2 + $0x5d8] sm:$0xff]
    %v259 = vld [vmem:[#allocation2 + $0x5e0] sm:$0xff]
    %v260 = vld [vmem:[#allocation2 + $0x5e8] sm:$0xff]
    %v261 = vld [vmem:[#allocation2 + $0x5f0] sm:$0xff]
    %v262 = vld [vmem:[#allocation2 + $0x5f8] sm:$0xff]
    %v263 = vld [vmem:[#allocation2 + $0x600] sm:$0xff]
    %v264 = vld [vmem:[#allocation2 + $0x608] sm:$0xff]
    %v265 = vld [vmem:[#allocation2 + $0x610] sm:$0xff]
    %v266 = vld [vmem:[#allocation2 + $0x618] sm:$0xff]
    %v267 = vld [vmem:[#allocation2 + $0x620] sm:$0xff]
    %v268 = vld [vmem:[#allocation2 + $0x628] sm:$0xff]
    %v269 = vld [vmem:[#allocation2 + $0x630] sm:$0xff]
    %v270 = vld [vmem:[#allocation2 + $0x638] sm:$0xff]
    %v271 = vld [vmem:[#allocation2 + $0x640] sm:$0xff]
    %v272 = vld [vmem:[#allocation2 + $0x648] sm:$0xff]
    %v273 = vld [vmem:[#allocation2 + $0x650] sm:$0xff]
    %v274 = vld [vmem:[#allocation2 + $0x658] sm:$0xff]
    %v275 = vld [vmem:[#allocation2 + $0x660] sm:$0xff]
    %v276 = vld [vmem:[#allocation2 + $0x668] sm:$0xff]
    %v277 = vld [vmem:[#allocation2 + $0x670] sm:$0xff]
    %v278 = vld [vmem:[#allocation2 + $0x678] sm:$0xff]
    %v279 = vld [vmem:[#allocation2 + $0x680] sm:$0xff]
    %v280 = vld [vmem:[#allocation2 + $0x688] sm:$0xff]
    %v281 = vld [vmem:[#allocation2 + $0x690] sm:$0xff]
    %v282 = vld [vmem:[#allocation2 + $0x698] sm:$0xff]
    %v283 = vld [vmem:[#allocation2 + $0x6a0] sm:$0xff]
    %v284 = vld [vmem:[#allocation2 + $0x6a8] sm:$0xff]
    %v285 = vld [vmem:[#allocation2 + $0x6b0] sm:$0xff]
    %v286 = vld [vmem:[#allocation2 + $0x6b8] sm:$0xff]
    %v287 = vld [vmem:[#allocation2 + $0x6c0] sm:$0xff]
    %v288 = vld [vmem:[#allocation2 + $0x6c8] sm:$0xff]
    %v289 = vld [vmem:[#allocation2 + $0x6d0] sm:$0xff]
    %v290 = vld [vmem:[#allocation2 + $0x6d8] sm:$0xff]
    %v291 = vld [vmem:[#allocation2 + $0x6e0] sm:$0xff]
    %v292 = vld [vmem:[#allocation2 + $0x6e8] sm:$0xff]
    %v293 = vld [vmem:[#allocation2 + $0x6f0] sm:$0xff]
    %v294 = vld [vmem:[#allocation2 + $0x6f8] sm:$0xff]
    %v295 = vld [vmem:[#allocation2 + $0x700] sm:$0xff]
    %v296 = vld [vmem:[#allocation2 + $0x708] sm:$0xff]
    %v297 = vld [vmem:[#allocation2 + $0x710] sm:$0xff]
    %v298 = vld [vmem:[#allocation2 + $0x718] sm:$0xff]
    %v299 = vld [vmem:[#allocation2 + $0x720] sm:$0xff]
    %v300 = vld [vmem:[#allocation2 + $0x728] sm:$0xff]
    %v301 = vld [vmem:[#allocation2 + $0x730] sm:$0xff]
    %v302 = vld [vmem:[#allocation2 + $0x738] sm:$0xff]
    %v303 = vld [vmem:[#allocation2 + $0x740] sm:$0xff]
    %v304 = vld [vmem:[#allocation2 + $0x748] sm:$0xff]
    %v305 = vld [vmem:[#allocation2 + $0x750] sm:$0xff]
    %v306 = vld [vmem:[#allocation2 + $0x758] sm:$0xff]
    %v307 = vld [vmem:[#allocation2 + $0x760] sm:$0xff]
    %v308 = vld [vmem:[#allocation2 + $0x768] sm:$0xff]
    %v309 = vld [vmem:[#allocation2 + $0x770] sm:$0xff]
    %v310 = vld [vmem:[#allocation2 + $0x778] sm:$0xff]
    %v551 = vunpack.c.l.b16 %v71
    %v552 = vunpack.c.h.b16 %v71
    %v553 = vunpack.c.l.b16 %v72
    %v554 = vunpack.c.h.b16 %v72
    %v555 = vunpack.c.l.b16 %v73
    %v556 = vunpack.c.h.b16 %v73
    %v557 = vunpack.c.l.b16 %v74
    %v558 = vunpack.c.h.b16 %v74
    %v559 = vunpack.c.l.b16 %v75
    %v560 = vunpack.c.h.b16 %v75
    %v561 = vunpack.c.l.b16 %v76
    %v562 = vunpack.c.h.b16 %v76
    %v563 = vunpack.c.l.b16 %v77
    %v564 = vunpack.c.h.b16 %v77
    %v565 = vunpack.c.l.b16 %v78
    %v566 = vunpack.c.h.b16 %v78
    %v567 = vunpack.c.l.b16 %v79
    %v568 = vunpack.c.h.b16 %v79
    %v569 = vunpack.c.l.b16 %v80
    %v570 = vunpack.c.h.b16 %v80
    %v571 = vunpack.c.l.b16 %v81
    %v572 = vunpack.c.h.b16 %v81
    %v573 = vunpack.c.l.b16 %v82
    %v574 = vunpack.c.h.b16 %v82
    %v575 = vunpack.c.l.b16 %v83
    %v576 = vunpack.c.h.b16 %v83
    %v577 = vunpack.c.l.b16 %v84
    %v578 = vunpack.c.h.b16 %v84
    %v579 = vunpack.c.l.b16 %v85
    %v580 = vunpack.c.h.b16 %v85
    %v581 = vunpack.c.l.b16 %v86
    %v582 = vunpack.c.h.b16 %v86
    %v583 = vunpack.c.l.b16 %v87
    %v584 = vunpack.c.h.b16 %v87
    %v585 = vunpack.c.l.b16 %v88
    %v586 = vunpack.c.h.b16 %v88
    %v587 = vunpack.c.l.b16 %v89
    %v588 = vunpack.c.h.b16 %v89
    %v589 = vunpack.c.l.b16 %v90
    %v590 = vunpack.c.h.b16 %v90
    %v591 = vunpack.c.l.b16 %v91
    %v592 = vunpack.c.h.b16 %v91
    %v593 = vunpack.c.l.b16 %v92
    %v594 = vunpack.c.h.b16 %v92
    %v595 = vunpack.c.l.b16 %v93
    %v596 = vunpack.c.h.b16 %v93
    %v597 = vunpack.c.l.b16 %v94
    %v598 = vunpack.c.h.b16 %v94
    %v599 = vunpack.c.l.b16 %v95
    %v600 = vunpack.c.h.b16 %v95
    %v601 = vunpack.c.l.b16 %v96
    %v602 = vunpack.c.h.b16 %v96
    %v603 = vunpack.c.l.b16 %v97
    %v604 = vunpack.c.h.b16 %v97
    %v605 = vunpack.c.l.b16 %v98
    %v606 = vunpack.c.h.b16 %v98
    %v607 = vunpack.c.l.b16 %v99
    %v608 = vunpack.c.h.b16 %v99
    %v609 = vunpack.c.l.b16 %v100
    %v610 = vunpack.c.h.b16 %v100
    %v611 = vunpack.c.l.b16 %v101
    %v612 = vunpack.c.h.b16 %v101
    %v613 = vunpack.c.l.b16 %v102
    %v614 = vunpack.c.h.b16 %v102
    %v615 = vunpack.c.l.b16 %v103
    %v616 = vunpack.c.h.b16 %v103
    %v617 = vunpack.c.l.b16 %v104
    %v618 = vunpack.c.h.b16 %v104
    %v619 = vunpack.c.l.b16 %v105
    %v620 = vunpack.c.h.b16 %v105
    %v621 = vunpack.c.l.b16 %v106
    %v622 = vunpack.c.h.b16 %v106
    %v623 = vunpack.c.l.b16 %v107
    %v624 = vunpack.c.h.b16 %v107
    %v625 = vunpack.c.l.b16 %v108
    %v626 = vunpack.c.h.b16 %v108
    %v627 = vunpack.c.l.b16 %v109
    %v628 = vunpack.c.h.b16 %v109
    %v629 = vunpack.c.l.b16 %v110
    %v630 = vunpack.c.h.b16 %v110
    %v631 = vunpack.c.l.b16 %v111
    %v632 = vunpack.c.h.b16 %v111
    %v633 = vunpack.c.l.b16 %v112
    %v634 = vunpack.c.h.b16 %v112
    %v635 = vunpack.c.l.b16 %v113
    %v636 = vunpack.c.h.b16 %v113
    %v637 = vunpack.c.l.b16 %v114
    %v638 = vunpack.c.h.b16 %v114
    %v639 = vunpack.c.l.b16 %v115
    %v640 = vunpack.c.h.b16 %v115
    %v641 = vunpack.c.l.b16 %v116
    %v642 = vunpack.c.h.b16 %v116
    %v643 = vunpack.c.l.b16 %v117
    %v644 = vunpack.c.h.b16 %v117
    %v645 = vunpack.c.l.b16 %v118
    %v646 = vunpack.c.h.b16 %v118
    %v647 = vunpack.c.l.b16 %v119
    %v648 = vunpack.c.h.b16 %v119
    %v649 = vunpack.c.l.b16 %v120
    %v650 = vunpack.c.h.b16 %v120
    %v651 = vunpack.c.l.b16 %v121
    %v652 = vunpack.c.h.b16 %v121
    %v653 = vunpack.c.l.b16 %v122
    %v654 = vunpack.c.h.b16 %v122
    %v655 = vunpack.c.l.b16 %v123
    %v656 = vunpack.c.h.b16 %v123
    %v657 = vunpack.c.l.b16 %v124
    %v658 = vunpack.c.h.b16 %v124
    %v659 = vunpack.c.l.b16 %v125
    %v660 = vunpack.c.h.b16 %v125
    %v661 = vunpack.c.l.b16 %v126
    %v662 = vunpack.c.h.b16 %v126
    %v663 = vunpack.c.l.b16 %v127
    %v664 = vunpack.c.h.b16 %v127
    %v665 = vunpack.c.l.b16 %v128
    %v666 = vunpack.c.h.b16 %v128
    %v667 = vunpack.c.l.b16 %v129
    %v668 = vunpack.c.h.b16 %v129
    %v669 = vunpack.c.l.b16 %v130
    %v670 = vunpack.c.h.b16 %v130
    %v671 = vunpack.c.l.b16 %v131
    %v672 = vunpack.c.h.b16 %v131
    %v673 = vunpack.c.l.b16 %v132
    %v674 = vunpack.c.h.b16 %v132
    %v675 = vunpack.c.l.b16 %v133
    %v676 = vunpack.c.h.b16 %v133
    %v677 = vunpack.c.l.b16 %v134
    %v678 = vunpack.c.h.b16 %v134
    %v679 = vunpack.c.l.b16 %v135
    %v680 = vunpack.c.h.b16 %v135
    %v681 = vunpack.c.l.b16 %v136
    %v682 = vunpack.c.h.b16 %v136
    %v683 = vunpack.c.l.b16 %v137
    %v684 = vunpack.c.h.b16 %v137
    %v685 = vunpack.c.l.b16 %v138
    %v686 = vunpack.c.h.b16 %v138
    %v687 = vunpack.c.l.b16 %v139
    %v688 = vunpack.c.h.b16 %v139
    %v689 = vunpack.c.l.b16 %v140
    %v690 = vunpack.c.h.b16 %v140
    %v691 = vunpack.c.l.b16 %v141
    %v692 = vunpack.c.h.b16 %v141
    %v693 = vunpack.c.l.b16 %v142
    %v694 = vunpack.c.h.b16 %v142
    %v695 = vunpack.c.l.b16 %v143
    %v696 = vunpack.c.h.b16 %v143
    %v697 = vunpack.c.l.b16 %v144
    %v698 = vunpack.c.h.b16 %v144
    %v699 = vunpack.c.l.b16 %v145
    %v700 = vunpack.c.h.b16 %v145
    %v701 = vunpack.c.l.b16 %v146
    %v702 = vunpack.c.h.b16 %v146
    %v703 = vunpack.c.l.b16 %v147
    %v704 = vunpack.c.h.b16 %v147
    %v705 = vunpack.c.l.b16 %v148
    %v706 = vunpack.c.h.b16 %v148
    %v707 = vunpack.c.l.b16 %v149
    %v708 = vunpack.c.h.b16 %v149
    %v709 = vunpack.c.l.b16 %v150
    %v710 = vunpack.c.h.b16 %v150
    %v711 = vunpack.c.l.b16 %v151
    %v712 = vunpack.c.h.b16 %v151
    %v713 = vunpack.c.l.b16 %v152
    %v714 = vunpack.c.h.b16 %v152
    %v715 = vunpack.c.l.b16 %v153
    %v716 = vunpack.c.h.b16 %v153
    %v717 = vunpack.c.l.b16 %v154
    %v718 = vunpack.c.h.b16 %v154
    %v719 = vunpack.c.l.b16 %v155
    %v720 = vunpack.c.h.b16 %v155
    %v721 = vunpack.c.l.b16 %v156
    %v722 = vunpack.c.h.b16 %v156
    %v723 = vunpack.c.l.b16 %v157
    %v724 = vunpack.c.h.b16 %v157
    %v725 = vunpack.c.l.b16 %v158
    %v726 = vunpack.c.h.b16 %v158
    %v727 = vunpack.c.l.b16 %v159
    %v728 = vunpack.c.h.b16 %v159
    %v729 = vunpack.c.l.b16 %v160
    %v730 = vunpack.c.h.b16 %v160
    %v731 = vunpack.c.l.b16 %v161
    %v732 = vunpack.c.h.b16 %v161
    %v733 = vunpack.c.l.b16 %v162
    %v734 = vunpack.c.h.b16 %v162
    %v735 = vunpack.c.l.b16 %v163
    %v736 = vunpack.c.h.b16 %v163
    %v737 = vunpack.c.l.b16 %v164
    %v738 = vunpack.c.h.b16 %v164
    %v739 = vunpack.c.l.b16 %v165
    %v740 = vunpack.c.h.b16 %v165
    %v741 = vunpack.c.l.b16 %v166
    %v742 = vunpack.c.h.b16 %v166
    %v743 = vunpack.c.l.b16 %v167
    %v744 = vunpack.c.h.b16 %v167
    %v745 = vunpack.c.l.b16 %v168
    %v746 = vunpack.c.h.b16 %v168
    %v747 = vunpack.c.l.b16 %v169
    %v748 = vunpack.c.h.b16 %v169
    %v749 = vunpack.c.l.b16 %v170
    %v750 = vunpack.c.h.b16 %v170
    %v751 = vunpack.c.l.b16 %v171
    %v752 = vunpack.c.h.b16 %v171
    %v753 = vunpack.c.l.b16 %v172
    %v754 = vunpack.c.h.b16 %v172
    %v755 = vunpack.c.l.b16 %v173
    %v756 = vunpack.c.h.b16 %v173
    %v757 = vunpack.c.l.b16 %v174
    %v758 = vunpack.c.h.b16 %v174
    %v759 = vunpack.c.l.b16 %v175
    %v760 = vunpack.c.h.b16 %v175
    %v761 = vunpack.c.l.b16 %v176
    %v762 = vunpack.c.h.b16 %v176
    %v763 = vunpack.c.l.b16 %v177
    %v764 = vunpack.c.h.b16 %v177
    %v765 = vunpack.c.l.b16 %v178
    %v766 = vunpack.c.h.b16 %v178
    %v767 = vunpack.c.l.b16 %v179
    %v768 = vunpack.c.h.b16 %v179
    %v769 = vunpack.c.l.b16 %v180
    %v770 = vunpack.c.h.b16 %v180
    %v771 = vunpack.c.l.b16 %v181
    %v772 = vunpack.c.h.b16 %v181
    %v773 = vunpack.c.l.b16 %v182
    %v774 = vunpack.c.h.b16 %v182
    %v775 = vunpack.c.l.b16 %v183
    %v776 = vunpack.c.h.b16 %v183
    %v777 = vunpack.c.l.b16 %v184
    %v778 = vunpack.c.h.b16 %v184
    %v779 = vunpack.c.l.b16 %v185
    %v780 = vunpack.c.h.b16 %v185
    %v781 = vunpack.c.l.b16 %v186
    %v782 = vunpack.c.h.b16 %v186
    %v783 = vunpack.c.l.b16 %v187
    %v784 = vunpack.c.h.b16 %v187
    %v785 = vunpack.c.l.b16 %v188
    %v786 = vunpack.c.h.b16 %v188
    %v787 = vunpack.c.l.b16 %v189
    %v788 = vunpack.c.h.b16 %v189
    %v789 = vunpack.c.l.b16 %v190
    %v790 = vunpack.c.h.b16 %v190
    %v791 = vunpack.c.l.b16 %v191
    %v792 = vunpack.c.h.b16 %v191
    %v793 = vunpack.c.l.b16 %v192
    %v794 = vunpack.c.h.b16 %v192
    %v795 = vunpack.c.l.b16 %v193
    %v796 = vunpack.c.h.b16 %v193
    %v797 = vunpack.c.l.b16 %v194
    %v798 = vunpack.c.h.b16 %v194
    %v799 = vunpack.c.l.b16 %v195
    %v800 = vunpack.c.h.b16 %v195
    %v801 = vunpack.c.l.b16 %v196
    %v802 = vunpack.c.h.b16 %v196
    %v803 = vunpack.c.l.b16 %v197
    %v804 = vunpack.c.h.b16 %v197
    %v805 = vunpack.c.l.b16 %v198
    %v806 = vunpack.c.h.b16 %v198
    %v807 = vunpack.c.l.b16 %v199
    %v808 = vunpack.c.h.b16 %v199
    %v809 = vunpack.c.l.b16 %v200
    %v810 = vunpack.c.h.b16 %v200
    %v811 = vunpack.c.l.b16 %v201
    %v812 = vunpack.c.h.b16 %v201
    %v813 = vunpack.c.l.b16 %v202
    %v814 = vunpack.c.h.b16 %v202
    %v815 = vunpack.c.l.b16 %v203
    %v816 = vunpack.c.h.b16 %v203
    %v817 = vunpack.c.l.b16 %v204
    %v818 = vunpack.c.h.b16 %v204
    %v819 = vunpack.c.l.b16 %v205
    %v820 = vunpack.c.h.b16 %v205
    %v821 = vunpack.c.l.b16 %v206
    %v822 = vunpack.c.h.b16 %v206
    %v823 = vunpack.c.l.b16 %v207
    %v824 = vunpack.c.h.b16 %v207
    %v825 = vunpack.c.l.b16 %v208
    %v826 = vunpack.c.h.b16 %v208
    %v827 = vunpack.c.l.b16 %v209
    %v828 = vunpack.c.h.b16 %v209
    %v829 = vunpack.c.l.b16 %v210
    %v830 = vunpack.c.h.b16 %v210
    %v831 = vunpack.c.l.b16 %v211
    %v832 = vunpack.c.h.b16 %v211
    %v833 = vunpack.c.l.b16 %v212
    %v834 = vunpack.c.h.b16 %v212
    %v835 = vunpack.c.l.b16 %v213
    %v836 = vunpack.c.h.b16 %v213
    %v837 = vunpack.c.l.b16 %v214
    %v838 = vunpack.c.h.b16 %v214
    %v839 = vunpack.c.l.b16 %v215
    %v840 = vunpack.c.h.b16 %v215
    %v841 = vunpack.c.l.b16 %v216
    %v842 = vunpack.c.h.b16 %v216
    %v843 = vunpack.c.l.b16 %v217
    %v844 = vunpack.c.h.b16 %v217
    %v845 = vunpack.c.l.b16 %v218
    %v846 = vunpack.c.h.b16 %v218
    %v847 = vunpack.c.l.b16 %v219
    %v848 = vunpack.c.h.b16 %v219
    %v849 = vunpack.c.l.b16 %v220
    %v850 = vunpack.c.h.b16 %v220
    %v851 = vunpack.c.l.b16 %v221
    %v852 = vunpack.c.h.b16 %v221
    %v853 = vunpack.c.l.b16 %v222
    %v854 = vunpack.c.h.b16 %v222
    %v855 = vunpack.c.l.b16 %v223
    %v856 = vunpack.c.h.b16 %v223
    %v857 = vunpack.c.l.b16 %v224
    %v858 = vunpack.c.h.b16 %v224
    %v859 = vunpack.c.l.b16 %v225
    %v860 = vunpack.c.h.b16 %v225
    %v861 = vunpack.c.l.b16 %v226
    %v862 = vunpack.c.h.b16 %v226
    %v863 = vunpack.c.l.b16 %v227
    %v864 = vunpack.c.h.b16 %v227
    %v865 = vunpack.c.l.b16 %v228
    %v866 = vunpack.c.h.b16 %v228
    %v867 = vunpack.c.l.b16 %v229
    %v868 = vunpack.c.h.b16 %v229
    %v869 = vunpack.c.l.b16 %v230
    %v870 = vunpack.c.h.b16 %v230
    %v871 = vunpack.c.l.b16 %v231
    %v872 = vunpack.c.h.b16 %v231
    %v873 = vunpack.c.l.b16 %v232
    %v874 = vunpack.c.h.b16 %v232
    %v875 = vunpack.c.l.b16 %v233
    %v876 = vunpack.c.h.b16 %v233
    %v877 = vunpack.c.l.b16 %v234
    %v878 = vunpack.c.h.b16 %v234
    %v879 = vunpack.c.l.b16 %v235
    %v880 = vunpack.c.h.b16 %v235
    %v881 = vunpack.c.l.b16 %v236
    %v882 = vunpack.c.h.b16 %v236
    %v883 = vunpack.c.l.b16 %v237
    %v884 = vunpack.c.h.b16 %v237
    %v885 = vunpack.c.l.b16 %v238
    %v886 = vunpack.c.h.b16 %v238
    %v887 = vunpack.c.l.b16 %v239
    %v888 = vunpack.c.h.b16 %v239
    %v889 = vunpack.c.l.b16 %v240
    %v890 = vunpack.c.h.b16 %v240
    %v891 = vunpack.c.l.b16 %v241
    %v892 = vunpack.c.h.b16 %v241
    %v893 = vunpack.c.l.b16 %v242
    %v894 = vunpack.c.h.b16 %v242
    %v895 = vunpack.c.l.b16 %v243
    %v896 = vunpack.c.h.b16 %v243
    %v897 = vunpack.c.l.b16 %v244
    %v898 = vunpack.c.h.b16 %v244
    %v899 = vunpack.c.l.b16 %v245
    %v900 = vunpack.c.h.b16 %v245
    %v901 = vunpack.c.l.b16 %v246
    %v902 = vunpack.c.h.b16 %v246
    %v903 = vunpack.c.l.b16 %v247
    %v904 = vunpack.c.h.b16 %v247
    %v905 = vunpack.c.l.b16 %v248
    %v906 = vunpack.c.h.b16 %v248
    %v907 = vunpack.c.l.b16 %v249
    %v908 = vunpack.c.h.b16 %v249
    %v909 = vunpack.c.l.b16 %v250
    %v910 = vunpack.c.h.b16 %v250
    %v911 = vunpack.c.l.b16 %v251
    %v912 = vunpack.c.h.b16 %v251
    %v913 = vunpack.c.l.b16 %v252
    %v914 = vunpack.c.h.b16 %v252
    %v915 = vunpack.c.l.b16 %v253
    %v916 = vunpack.c.h.b16 %v253
    %v917 = vunpack.c.l.b16 %v254
    %v918 = vunpack.c.h.b16 %v254
    %v919 = vunpack.c.l.b16 %v255
    %v920 = vunpack.c.h.b16 %v255
    %v921 = vunpack.c.l.b16 %v256
    %v922 = vunpack.c.h.b16 %v256
    %v923 = vunpack.c.l.b16 %v257
    %v924 = vunpack.c.h.b16 %v257
    %v925 = vunpack.c.l.b16 %v258
    %v926 = vunpack.c.h.b16 %v258
    %v927 = vunpack.c.l.b16 %v259
    %v928 = vunpack.c.h.b16 %v259
    %v929 = vunpack.c.l.b16 %v260
    %v930 = vunpack.c.h.b16 %v260
    %v931 = vunpack.c.l.b16 %v261
    %v932 = vunpack.c.h.b16 %v261
    %v933 = vunpack.c.l.b16 %v262
    %v934 = vunpack.c.h.b16 %v262
    %v935 = vunpack.c.l.b16 %v263
    %v936 = vunpack.c.h.b16 %v263
    %v937 = vunpack.c.l.b16 %v264
    %v938 = vunpack.c.h.b16 %v264
    %v939 = vunpack.c.l.b16 %v265
    %v940 = vunpack.c.h.b16 %v265
    %v941 = vunpack.c.l.b16 %v266
    %v942 = vunpack.c.h.b16 %v266
    %v943 = vunpack.c.l.b16 %v267
    %v944 = vunpack.c.h.b16 %v267
    %v945 = vunpack.c.l.b16 %v268
    %v946 = vunpack.c.h.b16 %v268
    %v947 = vunpack.c.l.b16 %v269
    %v948 = vunpack.c.h.b16 %v269
    %v949 = vunpack.c.l.b16 %v270
    %v950 = vunpack.c.h.b16 %v270
    %v951 = vunpack.c.l.b16 %v271
    %v952 = vunpack.c.h.b16 %v271
    %v953 = vunpack.c.l.b16 %v272
    %v954 = vunpack.c.h.b16 %v272
    %v955 = vunpack.c.l.b16 %v273
    %v956 = vunpack.c.h.b16 %v273
    %v957 = vunpack.c.l.b16 %v274
    %v958 = vunpack.c.h.b16 %v274
    %v959 = vunpack.c.l.b16 %v275
    %v960 = vunpack.c.h.b16 %v275
    %v961 = vunpack.c.l.b16 %v276
    %v962 = vunpack.c.h.b16 %v276
    %v963 = vunpack.c.l.b16 %v277
    %v964 = vunpack.c.h.b16 %v277
    %v965 = vunpack.c.l.b16 %v278
    %v966 = vunpack.c.h.b16 %v278
    %v967 = vunpack.c.l.b16 %v279
    %v968 = vunpack.c.h.b16 %v279
    %v969 = vunpack.c.l.b16 %v280
    %v970 = vunpack.c.h.b16 %v280
    %v971 = vunpack.c.l.b16 %v281
    %v972 = vunpack.c.h.b16 %v281
    %v973 = vunpack.c.l.b16 %v282
    %v974 = vunpack.c.h.b16 %v282
    %v975 = vunpack.c.l.b16 %v283
    %v976 = vunpack.c.h.b16 %v283
    %v977 = vunpack.c.l.b16 %v284
    %v978 = vunpack.c.h.b16 %v284
    %v979 = vunpack.c.l.b16 %v285
    %v980 = vunpack.c.h.b16 %v285
    %v981 = vunpack.c.l.b16 %v286
    %v982 = vunpack.c.h.b16 %v286
    %v983 = vunpack.c.l.b16 %v287
    %v984 = vunpack.c.h.b16 %v287
    %v985 = vunpack.c.l.b16 %v288
    %v986 = vunpack.c.h.b16 %v288
    %v987 = vunpack.c.l.b16 %v289
    %v988 = vunpack.c.h.b16 %v289
    %v989 = vunpack.c.l.b16 %v290
    %v990 = vunpack.c.h.b16 %v290
    %v991 = vunpack.c.l.b16 %v291
    %v992 = vunpack.c.h.b16 %v291
    %v993 = vunpack.c.l.b16 %v292
    %v994 = vunpack.c.h.b16 %v292
    %v995 = vunpack.c.l.b16 %v293
    %v996 = vunpack.c.h.b16 %v293
    %v997 = vunpack.c.l.b16 %v294
    %v998 = vunpack.c.h.b16 %v294
    %v999 = vunpack.c.l.b16 %v295
    %v1000 = vunpack.c.h.b16 %v295
    %v1001 = vunpack.c.l.b16 %v296
    %v1002 = vunpack.c.h.b16 %v296
    %v1003 = vunpack.c.l.b16 %v297
    %v1004 = vunpack.c.h.b16 %v297
    %v1005 = vunpack.c.l.b16 %v298
    %v1006 = vunpack.c.h.b16 %v298
    %v1007 = vunpack.c.l.b16 %v299
    %v1008 = vunpack.c.h.b16 %v299
    %v1009 = vunpack.c.l.b16 %v300
    %v1010 = vunpack.c.h.b16 %v300
    %v1011 = vunpack.c.l.b16 %v301
    %v1012 = vunpack.c.h.b16 %v301
    %v1013 = vunpack.c.l.b16 %v302
    %v1014 = vunpack.c.h.b16 %v302
    %v1015 = vunpack.c.l.b16 %v303
    %v1016 = vunpack.c.h.b16 %v303
    %v1017 = vunpack.c.l.b16 %v304
    %v1018 = vunpack.c.h.b16 %v304
    %v1019 = vunpack.c.l.b16 %v305
    %v1020 = vunpack.c.h.b16 %v305
    %v1021 = vunpack.c.l.b16 %v306
    %v1022 = vunpack.c.h.b16 %v306
    %v1023 = vunpack.c.l.b16 %v307
    %v1024 = vunpack.c.h.b16 %v307
    %v1025 = vunpack.c.l.b16 %v308
    %v1026 = vunpack.c.h.b16 %v308
    %v1027 = vunpack.c.l.b16 %v309
    %v1028 = vunpack.c.h.b16 %v309
    %v1029 = vunpack.c.l.b16 %v310
    %v1030 = vunpack.c.h.b16 %v310
    %v1031 = vpack.c.b16 %v557, %v551
    %v1032 = vpack.c.b16 %v558, %v552
    %v1033 = vpack.c.b16 %v559, %v553
    %v1034 = vpack.c.b16 %v560, %v554
    %v1035 = vpack.c.b16 %v561, %v555
    %v1036 = vpack.c.b16 %v562, %v556
    %v1037 = vpack.c.b16 %v569, %v563
    %v1038 = vpack.c.b16 %v570, %v564
    %v1039 = vpack.c.b16 %v571, %v565
    %v1040 = vpack.c.b16 %v572, %v566
    %v1041 = vpack.c.b16 %v573, %v567
    %v1042 = vpack.c.b16 %v574, %v568
    %v1043 = vpack.c.b16 %v581, %v575
    %v1044 = vpack.c.b16 %v582, %v576
    %v1045 = vpack.c.b16 %v583, %v577
    %v1046 = vpack.c.b16 %v584, %v578
    %v1047 = vpack.c.b16 %v585, %v579
    %v1048 = vpack.c.b16 %v586, %v580
    %v1049 = vpack.c.b16 %v593, %v587
    %v1050 = vpack.c.b16 %v594, %v588
    %v1051 = vpack.c.b16 %v595, %v589
    %v1052 = vpack.c.b16 %v596, %v590
    %v1053 = vpack.c.b16 %v597, %v591
    %v1054 = vpack.c.b16 %v598, %v592
    %v1055 = vpack.c.b16 %v605, %v599
    %v1056 = vpack.c.b16 %v606, %v600
    %v1057 = vpack.c.b16 %v607, %v601
    %v1058 = vpack.c.b16 %v608, %v602
    %v1059 = vpack.c.b16 %v609, %v603
    %v1060 = vpack.c.b16 %v610, %v604
    %v1061 = vpack.c.b16 %v617, %v611
    %v1062 = vpack.c.b16 %v618, %v612
    %v1063 = vpack.c.b16 %v619, %v613
    %v1064 = vpack.c.b16 %v620, %v614
    %v1065 = vpack.c.b16 %v621, %v615
    %v1066 = vpack.c.b16 %v622, %v616
    %v1067 = vpack.c.b16 %v629, %v623
    %v1068 = vpack.c.b16 %v630, %v624
    %v1069 = vpack.c.b16 %v631, %v625
    %v1070 = vpack.c.b16 %v632, %v626
    %v1071 = vpack.c.b16 %v633, %v627
    %v1072 = vpack.c.b16 %v634, %v628
    %v1073 = vpack.c.b16 %v641, %v635
    %v1074 = vpack.c.b16 %v642, %v636
    %v1075 = vpack.c.b16 %v643, %v637
    %v1076 = vpack.c.b16 %v644, %v638
    %v1077 = vpack.c.b16 %v645, %v639
    %v1078 = vpack.c.b16 %v646, %v640
    %v1079 = vpack.c.b16 %v653, %v647
    %v1080 = vpack.c.b16 %v654, %v648
    %v1081 = vpack.c.b16 %v655, %v649
    %v1082 = vpack.c.b16 %v656, %v650
    %v1083 = vpack.c.b16 %v657, %v651
    %v1084 = vpack.c.b16 %v658, %v652
    %v1085 = vpack.c.b16 %v665, %v659
    %v1086 = vpack.c.b16 %v666, %v660
    %v1087 = vpack.c.b16 %v667, %v661
    %v1088 = vpack.c.b16 %v668, %v662
    %v1089 = vpack.c.b16 %v669, %v663
    %v1090 = vpack.c.b16 %v670, %v664
    %v1091 = vpack.c.b16 %v677, %v671
    %v1092 = vpack.c.b16 %v678, %v672
    %v1093 = vpack.c.b16 %v679, %v673
    %v1094 = vpack.c.b16 %v680, %v674
    %v1095 = vpack.c.b16 %v681, %v675
    %v1096 = vpack.c.b16 %v682, %v676
    %v1097 = vpack.c.b16 %v689, %v683
    %v1098 = vpack.c.b16 %v690, %v684
    %v1099 = vpack.c.b16 %v691, %v685
    %v1100 = vpack.c.b16 %v692, %v686
    %v1101 = vpack.c.b16 %v693, %v687
    %v1102 = vpack.c.b16 %v694, %v688
    %v1103 = vpack.c.b16 %v701, %v695
    %v1104 = vpack.c.b16 %v702, %v696
    %v1105 = vpack.c.b16 %v703, %v697
    %v1106 = vpack.c.b16 %v704, %v698
    %v1107 = vpack.c.b16 %v705, %v699
    %v1108 = vpack.c.b16 %v706, %v700
    %v1109 = vpack.c.b16 %v713, %v707
    %v1110 = vpack.c.b16 %v714, %v708
    %v1111 = vpack.c.b16 %v715, %v709
    %v1112 = vpack.c.b16 %v716, %v710
    %v1113 = vpack.c.b16 %v717, %v711
    %v1114 = vpack.c.b16 %v718, %v712
    %v1115 = vpack.c.b16 %v725, %v719
    %v1116 = vpack.c.b16 %v726, %v720
    %v1117 = vpack.c.b16 %v727, %v721
    %v1118 = vpack.c.b16 %v728, %v722
    %v1119 = vpack.c.b16 %v729, %v723
    %v1120 = vpack.c.b16 %v730, %v724
    %v1121 = vpack.c.b16 %v737, %v731
    %v1122 = vpack.c.b16 %v738, %v732
    %v1123 = vpack.c.b16 %v739, %v733
    %v1124 = vpack.c.b16 %v740, %v734
    %v1125 = vpack.c.b16 %v741, %v735
    %v1126 = vpack.c.b16 %v742, %v736
    %v1127 = vpack.c.b16 %v749, %v743
    %v1128 = vpack.c.b16 %v750, %v744
    %v1129 = vpack.c.b16 %v751, %v745
    %v1130 = vpack.c.b16 %v752, %v746
    %v1131 = vpack.c.b16 %v753, %v747
    %v1132 = vpack.c.b16 %v754, %v748
    %v1133 = vpack.c.b16 %v761, %v755
    %v1134 = vpack.c.b16 %v762, %v756
    %v1135 = vpack.c.b16 %v763, %v757
    %v1136 = vpack.c.b16 %v764, %v758
    %v1137 = vpack.c.b16 %v765, %v759
    %v1138 = vpack.c.b16 %v766, %v760
    %v1139 = vpack.c.b16 %v773, %v767
    %v1140 = vpack.c.b16 %v774, %v768
    %v1141 = vpack.c.b16 %v775, %v769
    %v1142 = vpack.c.b16 %v776, %v770
    %v1143 = vpack.c.b16 %v777, %v771
    %v1144 = vpack.c.b16 %v778, %v772
    %v1145 = vpack.c.b16 %v785, %v779
    %v1146 = vpack.c.b16 %v786, %v780
    %v1147 = vpack.c.b16 %v787, %v781
    %v1148 = vpack.c.b16 %v788, %v782
    %v1149 = vpack.c.b16 %v789, %v783
    %v1150 = vpack.c.b16 %v790, %v784
    %v1151 = vpack.c.b16 %v797, %v791
    %v1152 = vpack.c.b16 %v798, %v792
    %v1153 = vpack.c.b16 %v799, %v793
    %v1154 = vpack.c.b16 %v800, %v794
    %v1155 = vpack.c.b16 %v801, %v795
    %v1156 = vpack.c.b16 %v802, %v796
    %v1157 = vpack.c.b16 %v809, %v803
    %v1158 = vpack.c.b16 %v810, %v804
    %v1159 = vpack.c.b16 %v811, %v805
    %v1160 = vpack.c.b16 %v812, %v806
    %v1161 = vpack.c.b16 %v813, %v807
    %v1162 = vpack.c.b16 %v814, %v808
    %v1163 = vpack.c.b16 %v821, %v815
    %v1164 = vpack.c.b16 %v822, %v816
    %v1165 = vpack.c.b16 %v823, %v817
    %v1166 = vpack.c.b16 %v824, %v818
    %v1167 = vpack.c.b16 %v825, %v819
    %v1168 = vpack.c.b16 %v826, %v820
    %v1169 = vpack.c.b16 %v833, %v827
    %v1170 = vpack.c.b16 %v834, %v828
    %v1171 = vpack.c.b16 %v835, %v829
    %v1172 = vpack.c.b16 %v836, %v830
    %v1173 = vpack.c.b16 %v837, %v831
    %v1174 = vpack.c.b16 %v838, %v832
    %v1175 = vpack.c.b16 %v845, %v839
    %v1176 = vpack.c.b16 %v846, %v840
    %v1177 = vpack.c.b16 %v847, %v841
    %v1178 = vpack.c.b16 %v848, %v842
    %v1179 = vpack.c.b16 %v849, %v843
    %v1180 = vpack.c.b16 %v850, %v844
    %v1181 = vpack.c.b16 %v857, %v851
    %v1182 = vpack.c.b16 %v858, %v852
    %v1183 = vpack.c.b16 %v859, %v853
    %v1184 = vpack.c.b16 %v860, %v854
    %v1185 = vpack.c.b16 %v861, %v855
    %v1186 = vpack.c.b16 %v862, %v856
    %v1187 = vpack.c.b16 %v869, %v863
    %v1188 = vpack.c.b16 %v870, %v864
    %v1189 = vpack.c.b16 %v871, %v865
    %v1190 = vpack.c.b16 %v872, %v866
    %v1191 = vpack.c.b16 %v873, %v867
    %v1192 = vpack.c.b16 %v874, %v868
    %v1193 = vpack.c.b16 %v881, %v875
    %v1194 = vpack.c.b16 %v882, %v876
    %v1195 = vpack.c.b16 %v883, %v877
    %v1196 = vpack.c.b16 %v884, %v878
    %v1197 = vpack.c.b16 %v885, %v879
    %v1198 = vpack.c.b16 %v886, %v880
    %v1199 = vpack.c.b16 %v893, %v887
    %v1200 = vpack.c.b16 %v894, %v888
    %v1201 = vpack.c.b16 %v895, %v889
    %v1202 = vpack.c.b16 %v896, %v890
    %v1203 = vpack.c.b16 %v897, %v891
    %v1204 = vpack.c.b16 %v898, %v892
    %v1205 = vpack.c.b16 %v905, %v899
    %v1206 = vpack.c.b16 %v906, %v900
    %v1207 = vpack.c.b16 %v907, %v901
    %v1208 = vpack.c.b16 %v908, %v902
    %v1209 = vpack.c.b16 %v909, %v903
    %v1210 = vpack.c.b16 %v910, %v904
    %v1211 = vpack.c.b16 %v917, %v911
    %v1212 = vpack.c.b16 %v918, %v912
    %v1213 = vpack.c.b16 %v919, %v913
    %v1214 = vpack.c.b16 %v920, %v914
    %v1215 = vpack.c.b16 %v921, %v915
    %v1216 = vpack.c.b16 %v922, %v916
    %v1217 = vpack.c.b16 %v929, %v923
    %v1218 = vpack.c.b16 %v930, %v924
    %v1219 = vpack.c.b16 %v931, %v925
    %v1220 = vpack.c.b16 %v932, %v926
    %v1221 = vpack.c.b16 %v933, %v927
    %v1222 = vpack.c.b16 %v934, %v928
    %v1223 = vpack.c.b16 %v941, %v935
    %v1224 = vpack.c.b16 %v942, %v936
    %v1225 = vpack.c.b16 %v943, %v937
    %v1226 = vpack.c.b16 %v944, %v938
    %v1227 = vpack.c.b16 %v945, %v939
    %v1228 = vpack.c.b16 %v946, %v940
    %v1229 = vpack.c.b16 %v953, %v947
    %v1230 = vpack.c.b16 %v954, %v948
    %v1231 = vpack.c.b16 %v955, %v949
    %v1232 = vpack.c.b16 %v956, %v950
    %v1233 = vpack.c.b16 %v957, %v951
    %v1234 = vpack.c.b16 %v958, %v952
    %v1235 = vpack.c.b16 %v965, %v959
    %v1236 = vpack.c.b16 %v966, %v960
    %v1237 = vpack.c.b16 %v967, %v961
    %v1238 = vpack.c.b16 %v968, %v962
    %v1239 = vpack.c.b16 %v969, %v963
    %v1240 = vpack.c.b16 %v970, %v964
    %v1241 = vpack.c.b16 %v977, %v971
    %v1242 = vpack.c.b16 %v978, %v972
    %v1243 = vpack.c.b16 %v979, %v973
    %v1244 = vpack.c.b16 %v980, %v974
    %v1245 = vpack.c.b16 %v981, %v975
    %v1246 = vpack.c.b16 %v982, %v976
    %v1247 = vpack.c.b16 %v989, %v983
    %v1248 = vpack.c.b16 %v990, %v984
    %v1249 = vpack.c.b16 %v991, %v985
    %v1250 = vpack.c.b16 %v992, %v986
    %v1251 = vpack.c.b16 %v993, %v987
    %v1252 = vpack.c.b16 %v994, %v988
    %v1253 = vpack.c.b16 %v1001, %v995
    %v1254 = vpack.c.b16 %v1002, %v996
    %v1255 = vpack.c.b16 %v1003, %v997
    %v1256 = vpack.c.b16 %v1004, %v998
    %v1257 = vpack.c.b16 %v1005, %v999
    %v1258 = vpack.c.b16 %v1006, %v1000
    %v1259 = vpack.c.b16 %v1013, %v1007
    %v1260 = vpack.c.b16 %v1014, %v1008
    %v1261 = vpack.c.b16 %v1015, %v1009
    %v1262 = vpack.c.b16 %v1016, %v1010
    %v1263 = vpack.c.b16 %v1017, %v1011
    %v1264 = vpack.c.b16 %v1018, %v1012
    %v1265 = vpack.c.b16 %v1025, %v1019
    %v1266 = vpack.c.b16 %v1026, %v1020
    %v1267 = vpack.c.b16 %v1027, %v1021
    %v1268 = vpack.c.b16 %v1028, %v1022
    %v1269 = vpack.c.b16 %v1029, %v1023
    %v1270 = vpack.c.b16 %v1030, %v1024
    %1511 = vmatprep.subr.bf16.mxu0 %v1032
    %1512 = vmatpush1.bf16.msra.mxu0 %v1031
    %1513 = vmatprep.subr.bf16.mxu0 %v1038
    %1514 = vmatpush1.bf16.msra.mxu0 %v1037
    %1515 = vmatprep.subr.bf16.mxu0 %v1044
    %1516 = vmatpush1.bf16.msra.mxu0 %v1043
    %1517 = vmatprep.subr.bf16.mxu0 %v1050
    %1518 = vmatpush1.bf16.msra.mxu0 %v1049
    %1519 = vmatprep.subr.bf16.mxu0 %v1056
    %1520 = vmatpush1.bf16.msra.mxu0 %v1055
    %1521 = vmatprep.subr.bf16.mxu0 %v1062
    %1522 = vmatpush1.bf16.msra.mxu0 %v1061
    %1523 = vmatprep.subr.bf16.mxu0 %v1068
    %1524 = vmatpush1.bf16.msra.mxu0 %v1067
    %1525 = vmatprep.subr.bf16.mxu0 %v1074
    %1526 = vmatpush1.bf16.msra.mxu0 %v1073
    %1527 = vmatprep.subr.bf16.mxu0 %v1080
    %1528 = vmatpush1.bf16.msra.mxu0 %v1079
    %1529 = vmatprep.subr.bf16.mxu0 %v1086
    %1530 = vmatpush1.bf16.msra.mxu0 %v1085
    %1531 = vmatprep.subr.bf16.mxu0 %v1092
    %1532 = vmatpush1.bf16.msra.mxu0 %v1091
    %1533 = vmatprep.subr.bf16.mxu0 %v1098
    %1534 = vmatpush1.bf16.msra.mxu0 %v1097
    %1535 = vmatprep.subr.bf16.mxu0 %v1104
    %1536 = vmatpush1.bf16.msra.mxu0 %v1103
    %1537 = vmatprep.subr.bf16.mxu0 %v1110
    %1538 = vmatpush1.bf16.msra.mxu0 %v1109
    %1539 = vmatprep.subr.bf16.mxu0 %v1116
    %1540 = vmatpush1.bf16.msra.mxu0 %v1115
    %1541 = vmatprep.subr.bf16.mxu0 %v1122
    %1542 = vmatpush1.bf16.msra.mxu0 %v1121
    %1543 = vmatprep.mubr.bf16.mxu0 %v67
    %1544 = vmatmul.mubr.bf16.gmra.mrb[0].mxu0 %v66
    %v1545 = vpop.f32.mrb[0].mxu0
    %v1546 = vadd.f32 0.0, %v1545
    %v1547 = vpop.f32.mrb[0].mxu0
    %v1548 = vadd.f32 0.0, %v1547
    %v1549 = vpop.f32.mrb[0].mxu0
    %v1550 = vpop.f32.mrb[0].mxu0
    %1551 = vdwg.mxu0
    %1552 = vmatprep.subr.bf16.mxu0 %v1128
    %1553 = vmatpush1.bf16.msra.mxu0 %v1127
    %1554 = vmatprep.subr.bf16.mxu0 %v1134
    %1555 = vmatpush1.bf16.msra.mxu0 %v1133
    %1556 = vmatprep.subr.bf16.mxu0 %v1140
    %1557 = vmatpush1.bf16.msra.mxu0 %v1139
    %1558 = vmatprep.subr.bf16.mxu0 %v1146
    %1559 = vmatpush1.bf16.msra.mxu0 %v1145
    %1560 = vmatprep.subr.bf16.mxu0 %v1152
    %1561 = vmatpush1.bf16.msra.mxu0 %v1151
    %1562 = vmatprep.subr.bf16.mxu0 %v1158
    %1563 = vmatpush1.bf16.msra.mxu0 %v1157
    %1564 = vmatprep.subr.bf16.mxu0 %v1164
    %1565 = vmatpush1.bf16.msra.mxu0 %v1163
    %1566 = vmatprep.subr.bf16.mxu0 %v1170
    %1567 = vmatpush1.bf16.msra.mxu0 %v1169
    %1568 = vmatprep.subr.bf16.mxu0 %v1176
    %1569 = vmatpush1.bf16.msra.mxu0 %v1175
    %1570 = vmatprep.subr.bf16.mxu0 %v1182
    %1571 = vmatpush1.bf16.msra.mxu0 %v1181
    %1572 = vmatprep.subr.bf16.mxu0 %v1188
    %1573 = vmatpush1.bf16.msra.mxu0 %v1187
    %1574 = vmatprep.subr.bf16.mxu0 %v1194
    %1575 = vmatpush1.bf16.msra.mxu0 %v1193
    %1576 = vmatprep.subr.bf16.mxu0 %v1200
    %1577 = vmatpush1.bf16.msra.mxu0 %v1199
    %1578 = vmatprep.subr.bf16.mxu0 %v1206
    %1579 = vmatpush1.bf16.msra.mxu0 %v1205
    %1580 = vmatprep.subr.bf16.mxu0 %v1212
    %1581 = vmatpush1.bf16.msra.mxu0 %v1211
    %1582 = vmatprep.subr.bf16.mxu0 %v1218
    %1583 = vmatpush1.bf16.msra.mxu0 %v1217
    %1584 = vmatprep.mubr.bf16.mxu0 %v69
    %1585 = vmatmul.mubr.bf16.gmra.mrb[0].mxu0 %v68
    %v1586 = vpop.f32.mrb[0].mxu0
    %v1587 = vadd.f32 %v1546, %v1586
    %v1588 = vpop.f32.mrb[0].mxu0
    %v1589 = vadd.f32 %v1548, %v1588
    %v1590 = vpop.f32.mrb[0].mxu0
    %v1591 = vpop.f32.mrb[0].mxu0
    %1592 = vdwg.mxu0
    %1593 = vmatprep.subr.bf16.mxu0 %v1224
    %1594 = vmatpush1.bf16.msra.mxu0 %v1223
    %1595 = vmatprep.subr.bf16.mxu0 %v1230
    %1596 = vmatpush1.bf16.msra.mxu0 %v1229
    %1597 = vmatprep.subr.bf16.mxu0 %v1236
    %1598 = vmatpush1.bf16.msra.mxu0 %v1235
    %1599 = vmatprep.subr.bf16.mxu0 %v1242
    %1600 = vmatpush1.bf16.msra.mxu0 %v1241
    %1601 = vmatprep.subr.bf16.mxu0 %v1248
    %1602 = vmatpush1.bf16.msra.mxu0 %v1247
    %1603 = vmatprep.subr.bf16.mxu0 %v1254
    %1604 = vmatpush1.bf16.msra.mxu0 %v1253
    %1605 = vmatprep.subr.bf16.mxu0 %v1260
    %1606 = vmatpush1.bf16.msra.mxu0 %v1259
    %1607 = vmatprep.subr.bf16.mxu0 %v1266
    %1608 = vmatpush1.bf16.msra.mxu0 %v1265
    %1609 = vmatprep.subr.bf16.mxu0 0
    %1610 = vmatpush1.bf16.msra.mxu0 0
    %1611 = vmatprep.subr.bf16.mxu0 0
    %1612 = vmatpush1.bf16.msra.mxu0 0
    %1613 = vmatprep.subr.bf16.mxu0 0
    %1614 = vmatpush1.bf16.msra.mxu0 0
    %1615 = vmatprep.subr.bf16.mxu0 0
    %1616 = vmatpush1.bf16.msra.mxu0 0
    %1617 = vmatprep.subr.bf16.mxu0 0
    %1618 = vmatpush1.bf16.msra.mxu0 0
    %1619 = vmatprep.subr.bf16.mxu0 0
    %1620 = vmatpush1.bf16.msra.mxu0 0
    %1621 = vmatprep.subr.bf16.mxu0 0
    %1622 = vmatpush1.bf16.msra.mxu0 0
    %1623 = vmatprep.subr.bf16.mxu0 0
    %1624 = vmatpush1.bf16.msra.mxu0 0
    %1625 = vmatprep.mubr.bf16.mxu0 0
    %1626 = vmatmul.mubr.bf16.gmra.mrb[0].mxu0 %v70
    %v1627 = vpop.f32.mrb[0].mxu0
    %v1628 = vadd.f32 %v1587, %v1627
    %v1629 = vpop.f32.mrb[0].mxu0
    %v1630 = vadd.f32 %v1589, %v1629
    %v1631 = vpop.f32.mrb[0].mxu0
    %v1632 = vpop.f32.mrb[0].mxu0
    %1633 = vdwg.mxu0
    %1634 = vmatprep.subr.bf16.mxu0 %v1034
    %1635 = vmatpush1.bf16.msra.mxu0 %v1033
    %1636 = vmatprep.subr.bf16.mxu0 %v1040
    %1637 = vmatpush1.bf16.msra.mxu0 %v1039
    %1638 = vmatprep.subr.bf16.mxu0 %v1046
    %1639 = vmatpush1.bf16.msra.mxu0 %v1045
    %1640 = vmatprep.subr.bf16.mxu0 %v1052
    %1641 = vmatpush1.bf16.msra.mxu0 %v1051
    %1642 = vmatprep.subr.bf16.mxu0 %v1058
    %1643 = vmatpush1.bf16.msra.mxu0 %v1057
    %1644 = vmatprep.subr.bf16.mxu0 %v1064
    %1645 = vmatpush1.bf16.msra.mxu0 %v1063
    %1646 = vmatprep.subr.bf16.mxu0 %v1070
    %1647 = vmatpush1.bf16.msra.mxu0 %v1069
    %1648 = vmatprep.subr.bf16.mxu0 %v1076
    %1649 = vmatpush1.bf16.msra.mxu0 %v1075
    %1650 = vmatprep.subr.bf16.mxu0 %v1082
    %1651 = vmatpush1.bf16.msra.mxu0 %v1081
    %1652 = vmatprep.subr.bf16.mxu0 %v1088
    %1653 = vmatpush1.bf16.msra.mxu0 %v1087
    %1654 = vmatprep.subr.bf16.mxu0 %v1094
    %1655 = vmatpush1.bf16.msra.mxu0 %v1093
    %1656 = vmatprep.subr.bf16.mxu0 %v1100
    %1657 = vmatpush1.bf16.msra.mxu0 %v1099
    %1658 = vmatprep.subr.bf16.mxu0 %v1106
    %1659 = vmatpush1.bf16.msra.mxu0 %v1105
    %1660 = vmatprep.subr.bf16.mxu0 %v1112
    %1661 = vmatpush1.bf16.msra.mxu0 %v1111
    %1662 = vmatprep.subr.bf16.mxu0 %v1118
    %1663 = vmatpush1.bf16.msra.mxu0 %v1117
    %1664 = vmatprep.subr.bf16.mxu0 %v1124
    %1665 = vmatpush1.bf16.msra.mxu0 %v1123
    %1666 = vmatprep.mubr.bf16.mxu0 %v67
    %1667 = vmatmul.mubr.bf16.gmra.mrb[0].mxu0 %v66
    %v1668 = vpop.f32.mrb[0].mxu0
    %v1669 = vadd.f32 0.0, %v1668
    %v1670 = vpop.f32.mrb[0].mxu0
    %v1671 = vadd.f32 0.0, %v1670
    %v1672 = vpop.f32.mrb[0].mxu0
    %v1673 = vpop.f32.mrb[0].mxu0
    %1674 = vdwg.mxu0
    %1675 = vmatprep.subr.bf16.mxu0 %v1130
    %1676 = vmatpush1.bf16.msra.mxu0 %v1129
    %1677 = vmatprep.subr.bf16.mxu0 %v1136
    %1678 = vmatpush1.bf16.msra.mxu0 %v1135
    %1679 = vmatprep.subr.bf16.mxu0 %v1142
    %1680 = vmatpush1.bf16.msra.mxu0 %v1141
    %1681 = vmatprep.subr.bf16.mxu0 %v1148
    %1682 = vmatpush1.bf16.msra.mxu0 %v1147
    %1683 = vmatprep.subr.bf16.mxu0 %v1154
    %1684 = vmatpush1.bf16.msra.mxu0 %v1153
    %1685 = vmatprep.subr.bf16.mxu0 %v1160
    %1686 = vmatpush1.bf16.msra.mxu0 %v1159
    %1687 = vmatprep.subr.bf16.mxu0 %v1166
    %1688 = vmatpush1.bf16.msra.mxu0 %v1165
    %1689 = vmatprep.subr.bf16.mxu0 %v1172
    %1690 = vmatpush1.bf16.msra.mxu0 %v1171
    %1691 = vmatprep.subr.bf16.mxu0 %v1178
    %1692 = vmatpush1.bf16.msra.mxu0 %v1177
    %1693 = vmatprep.subr.bf16.mxu0 %v1184
    %1694 = vmatpush1.bf16.msra.mxu0 %v1183
    %1695 = vmatprep.subr.bf16.mxu0 %v1190
    %1696 = vmatpush1.bf16.msra.mxu0 %v1189
    %1697 = vmatprep.subr.bf16.mxu0 %v1196
    %1698 = vmatpush1.bf16.msra.mxu0 %v1195
    %1699 = vmatprep.subr.bf16.mxu0 %v1202
    %1700 = vmatpush1.bf16.msra.mxu0 %v1201
    %1701 = vmatprep.subr.bf16.mxu0 %v1208
    %1702 = vmatpush1.bf16.msra.mxu0 %v1207
    %1703 = vmatprep.subr.bf16.mxu0 %v1214
    %1704 = vmatpush1.bf16.msra.mxu0 %v1213
    %1705 = vmatprep.subr.bf16.mxu0 %v1220
    %1706 = vmatpush1.bf16.msra.mxu0 %v1219
    %1707 = vmatprep.mubr.bf16.mxu0 %v69
    %1708 = vmatmul.mubr.bf16.gmra.mrb[0].mxu0 %v68
    %v1709 = vpop.f32.mrb[0].mxu0
    %v1710 = vadd.f32 %v1669, %v1709
    %v1711 = vpop.f32.mrb[0].mxu0
    %v1712 = vadd.f32 %v1671, %v1711
    %v1713 = vpop.f32.mrb[0].mxu0
    %v1714 = vpop.f32.mrb[0].mxu0
    %1715 = vdwg.mxu0
    %1716 = vmatprep.subr.bf16.mxu0 %v1226
    %1717 = vmatpush1.bf16.msra.mxu0 %v1225
    %1718 = vmatprep.subr.bf16.mxu0 %v1232
    %1719 = vmatpush1.bf16.msra.mxu0 %v1231
    %1720 = vmatprep.subr.bf16.mxu0 %v1238
    %1721 = vmatpush1.bf16.msra.mxu0 %v1237
    %1722 = vmatprep.subr.bf16.mxu0 %v1244
    %1723 = vmatpush1.bf16.msra.mxu0 %v1243
    %1724 = vmatprep.subr.bf16.mxu0 %v1250
    %1725 = vmatpush1.bf16.msra.mxu0 %v1249
    %1726 = vmatprep.subr.bf16.mxu0 %v1256
    %1727 = vmatpush1.bf16.msra.mxu0 %v1255
    %1728 = vmatprep.subr.bf16.mxu0 %v1262
    %1729 = vmatpush1.bf16.msra.mxu0 %v1261
    %1730 = vmatprep.subr.bf16.mxu0 %v1268
    %1731 = vmatpush1.bf16.msra.mxu0 %v1267
    %1732 = vmatprep.subr.bf16.mxu0 0
    %1733 = vmatpush1.bf16.msra.mxu0 0
    %1734 = vmatprep.subr.bf16.mxu0 0
    %1735 = vmatpush1.bf16.msra.mxu0 0
    %1736 = vmatprep.subr.bf16.mxu0 0
    %1737 = vmatpush1.bf16.msra.mxu0 0
    %1738 = vmatprep.subr.bf16.mxu0 0
    %1739 = vmatpush1.bf16.msra.mxu0 0
    %1740 = vmatprep.subr.bf16.mxu0 0
    %1741 = vmatpush1.bf16.msra.mxu0 0
    %1742 = vmatprep.subr.bf16.mxu0 0
    %1743 = vmatpush1.bf16.msra.mxu0 0
    %1744 = vmatprep.subr.bf16.mxu0 0
    %1745 = vmatpush1.bf16.msra.mxu0 0
    %1746 = vmatprep.subr.bf16.mxu0 0
    %1747 = vmatpush1.bf16.msra.mxu0 0
    %1748 = vmatprep.mubr.bf16.mxu0 0
    %1749 = vmatmul.mubr.bf16.gmra.mrb[0].mxu0 %v70
    %v1750 = vpop.f32.mrb[0].mxu0
    %v1751 = vadd.f32 %v1710, %v1750
    %v1752 = vpop.f32.mrb[0].mxu0
    %v1753 = vadd.f32 %v1712, %v1752
    %v1754 = vpop.f32.mrb[0].mxu0
    %v1755 = vpop.f32.mrb[0].mxu0
    %1756 = vdwg.mxu0
    %1757 = vmatprep.subr.bf16.mxu0 %v1036
    %1758 = vmatpush1.bf16.msra.mxu0 %v1035
    %1759 = vmatprep.subr.bf16.mxu0 %v1042
    %1760 = vmatpush1.bf16.msra.mxu0 %v1041
    %1761 = vmatprep.subr.bf16.mxu0 %v1048
    %1762 = vmatpush1.bf16.msra.mxu0 %v1047
    %1763 = vmatprep.subr.bf16.mxu0 %v1054
    %1764 = vmatpush1.bf16.msra.mxu0 %v1053
    %1765 = vmatprep.subr.bf16.mxu0 %v1060
    %1766 = vmatpush1.bf16.msra.mxu0 %v1059
    %1767 = vmatprep.subr.bf16.mxu0 %v1066
    %1768 = vmatpush1.bf16.msra.mxu0 %v1065
    %1769 = vmatprep.subr.bf16.mxu0 %v1072
    %1770 = vmatpush1.bf16.msra.mxu0 %v1071
    %1771 = vmatprep.subr.bf16.mxu0 %v1078
    %1772 = vmatpush1.bf16.msra.mxu0 %v1077
    %1773 = vmatprep.subr.bf16.mxu0 %v1084
    %1774 = vmatpush1.bf16.msra.mxu0 %v1083
    %1775 = vmatprep.subr.bf16.mxu0 %v1090
    %1776 = vmatpush1.bf16.msra.mxu0 %v1089
    %1777 = vmatprep.subr.bf16.mxu0 %v1096
    %1778 = vmatpush1.bf16.msra.mxu0 %v1095
    %1779 = vmatprep.subr.bf16.mxu0 %v1102
    %1780 = vmatpush1.bf16.msra.mxu0 %v1101
    %1781 = vmatprep.subr.bf16.mxu0 %v1108
    %1782 = vmatpush1.bf16.msra.mxu0 %v1107
    %1783 = vmatprep.subr.bf16.mxu0 %v1114
    %1784 = vmatpush1.bf16.msra.mxu0 %v1113
    %1785 = vmatprep.subr.bf16.mxu0 %v1120
    %1786 = vmatpush1.bf16.msra.mxu0 %v1119
    %1787 = vmatprep.subr.bf16.mxu0 %v1126
    %1788 = vmatpush1.bf16.msra.mxu0 %v1125
    %1789 = vmatprep.mubr.bf16.mxu0 %v67
    %1790 = vmatmul.mubr.bf16.gmra.mrb[0].mxu0 %v66
    %v1791 = vpop.f32.mrb[0].mxu0
    %v1792 = vadd.f32 0.0, %v1791
    %v1793 = vpop.f32.mrb[0].mxu0
    %v1794 = vadd.f32 0.0, %v1793
    %v1795 = vpop.f32.mrb[0].mxu0
    %v1796 = vpop.f32.mrb[0].mxu0
    %1797 = vdwg.mxu0
    %1798 = vmatprep.subr.bf16.mxu0 %v1132
    %1799 = vmatpush1.bf16.msra.mxu0 %v1131
    %1800 = vmatprep.subr.bf16.mxu0 %v1138
    %1801 = vmatpush1.bf16.msra.mxu0 %v1137
    %1802 = vmatprep.subr.bf16.mxu0 %v1144
    %1803 = vmatpush1.bf16.msra.mxu0 %v1143
    %1804 = vmatprep.subr.bf16.mxu0 %v1150
    %1805 = vmatpush1.bf16.msra.mxu0 %v1149
    %1806 = vmatprep.subr.bf16.mxu0 %v1156
    %1807 = vmatpush1.bf16.msra.mxu0 %v1155
    %1808 = vmatprep.subr.bf16.mxu0 %v1162
    %1809 = vmatpush1.bf16.msra.mxu0 %v1161
    %1810 = vmatprep.subr.bf16.mxu0 %v1168
    %1811 = vmatpush1.bf16.msra.mxu0 %v1167
    %1812 = vmatprep.subr.bf16.mxu0 %v1174
    %1813 = vmatpush1.bf16.msra.mxu0 %v1173
    %1814 = vmatprep.subr.bf16.mxu0 %v1180
    %1815 = vmatpush1.bf16.msra.mxu0 %v1179
    %1816 = vmatprep.subr.bf16.mxu0 %v1186
    %1817 = vmatpush1.bf16.msra.mxu0 %v1185
    %1818 = vmatprep.subr.bf16.mxu0 %v1192
    %1819 = vmatpush1.bf16.msra.mxu0 %v1191
    %1820 = vmatprep.subr.bf16.mxu0 %v1198
    %1821 = vmatpush1.bf16.msra.mxu0 %v1197
    %1822 = vmatprep.subr.bf16.mxu0 %v1204
    %1823 = vmatpush1.bf16.msra.mxu0 %v1203
    %1824 = vmatprep.subr.bf16.mxu0 %v1210
    %1825 = vmatpush1.bf16.msra.mxu0 %v1209
    %1826 = vmatprep.subr.bf16.mxu0 %v1216
    %1827 = vmatpush1.bf16.msra.mxu0 %v1215
    %1828 = vmatprep.subr.bf16.mxu0 %v1222
    %1829 = vmatpush1.bf16.msra.mxu0 %v1221
    %1830 = vmatprep.mubr.bf16.mxu0 %v69
    %1831 = vmatmul.mubr.bf16.gmra.mrb[0].mxu0 %v68
    %v1832 = vpop.f32.mrb[0].mxu0
    %v1833 = vadd.f32 %v1792, %v1832
    %v1834 = vpop.f32.mrb[0].mxu0
    %v1835 = vadd.f32 %v1794, %v1834
    %v1836 = vpop.f32.mrb[0].mxu0
    %v1837 = vpop.f32.mrb[0].mxu0
    %1838 = vdwg.mxu0
    %1839 = vmatprep.subr.bf16.mxu0 %v1228
    %1840 = vmatpush1.bf16.msra.mxu0 %v1227
    %1841 = vmatprep.subr.bf16.mxu0 %v1234
    %1842 = vmatpush1.bf16.msra.mxu0 %v1233
    %1843 = vmatprep.subr.bf16.mxu0 %v1240
    %1844 = vmatpush1.bf16.msra.mxu0 %v1239
    %1845 = vmatprep.subr.bf16.mxu0 %v1246
    %1846 = vmatpush1.bf16.msra.mxu0 %v1245
    %1847 = vmatprep.subr.bf16.mxu0 %v1252
    %1848 = vmatpush1.bf16.msra.mxu0 %v1251
    %1849 = vmatprep.subr.bf16.mxu0 %v1258
    %1850 = vmatpush1.bf16.msra.mxu0 %v1257
    %1851 = vmatprep.subr.bf16.mxu0 %v1264
    %1852 = vmatpush1.bf16.msra.mxu0 %v1263
    %1853 = vmatprep.subr.bf16.mxu0 %v1270
    %1854 = vmatpush1.bf16.msra.mxu0 %v1269
    %1855 = vmatprep.subr.bf16.mxu0 0
    %1856 = vmatpush1.bf16.msra.mxu0 0
    %1857 = vmatprep.subr.bf16.mxu0 0
    %1858 = vmatpush1.bf16.msra.mxu0 0
    %1859 = vmatprep.subr.bf16.mxu0 0
    %1860 = vmatpush1.bf16.msra.mxu0 0
    %1861 = vmatprep.subr.bf16.mxu0 0
    %1862 = vmatpush1.bf16.msra.mxu0 0
    %1863 = vmatprep.subr.bf16.mxu0 0
    %1864 = vmatpush1.bf16.msra.mxu0 0
    %1865 = vmatprep.subr.bf16.mxu0 0
    %1866 = vmatpush1.bf16.msra.mxu0 0
    %1867 = vmatprep.subr.bf16.mxu0 0
    %1868 = vmatpush1.bf16.msra.mxu0 0
    %1869 = vmatprep.subr.bf16.mxu0 0
    %1870 = vmatpush1.bf16.msra.mxu0 0
    %1871 = vmatprep.mubr.bf16.mxu0 0
    %1872 = vmatmul.mubr.bf16.gmra.mrb[0].mxu0 %v70
    %v1873 = vpop.f32.mrb[0].mxu0
    %v1874 = vadd.f32 %v1833, %v1873
    %v1875 = vpop.f32.mrb[0].mxu0
    %v1876 = vadd.f32 %v1835, %v1875
    %v1877 = vpop.f32.mrb[0].mxu0
    %v1878 = vpop.f32.mrb[0].mxu0
    %1879 = vdwg.mxu0
    %v1880 = vmax.f32 %v1628, %v1753
    %v1881 = vmax.f32 %v1630, %v1874
    %v1882 = vmax.f32 %v1751, %v1876
    %v1883 = vld [vmem:[%s2] sm:$0x7]
    %v1885 = vlaneseq
    %v1886 = vshrl.u32 %v1885, 7
    %v1887 = vsub.s32 0, %v1886
    %v1888 = vrot.slane %v1883, %v1887
    %v1889 = vlaneseq
    %v1890 = vshrl.u32 %v1889, 7
    %v1891 = vsub.s32 1, %v1890
    %v1892 = vrot.slane %v1883, %v1891
    %v1893 = vlaneseq
    %v1894 = vshrl.u32 %v1893, 7
    %v1895 = vsub.s32 2, %v1894
    %v1896 = vrot.slane %v1883, %v1895
    %v1900 = vadd.f32 %v1880, %v1888
    %v1901 = vadd.f32 %v1881, %v1892
    %v1902 = vadd.f32 %v1882, %v1896
    %v1903 = vmax.f32 %v1900, 0.0
    %v1904 = vmax.f32 %v1901, 0.0
    %v1905 = vmax.f32 %v1902, 0.0
    %v1906 = vpack.c.bf16 %v1903, %v1903
    %v1907 = vpack.c.bf16 %v1904, %v1904
    %v1908 = vpack.c.bf16 %v1905, %v1905
    %v1909 = vld [vmem:[#allocation4] sm:$0xff]
    %v1910 = vld [vmem:[#allocation4 + $0x8] sm:$0xff]
    %v1911 = vld [vmem:[#allocation4 + $0x10] sm:$0xff]
    %v1912 = vld [vmem:[#allocation4 + $0x18] sm:$0xff]
    %v1913 = vld [vmem:[#allocation4 + $0x20] sm:$0xff]
    %v1914 = vld [vmem:[#allocation4 + $0x28] sm:$0xff]
    %v1915 = vld [vmem:[#allocation4 + $0x30] sm:$0xff]
    %v1916 = vld [vmem:[#allocation4 + $0x38] sm:$0xff]
    %v1917 = vld [vmem:[#allocation4 + $0x40] sm:$0xff]
    %v1918 = vld [vmem:[#allocation4 + $0x48] sm:$0xff]
    %v1919 = vld [vmem:[#allocation4 + $0x50] sm:$0xff]
    %v1920 = vld [vmem:[#allocation4 + $0x58] sm:$0xff]
    %v1921 = vld [vmem:[#allocation4 + $0x60] sm:$0xff]
    %v1922 = vld [vmem:[#allocation4 + $0x68] sm:$0xff]
    %v1923 = vld [vmem:[#allocation4 + $0x70] sm:$0xff]
    %v1924 = vld [vmem:[#allocation4 + $0x78] sm:$0xff]
    %v1925 = vld [vmem:[#allocation4 + $0x80] sm:$0xff]
    %v1926 = vld [vmem:[#allocation4 + $0x88] sm:$0xff]
    %v1927 = vld [vmem:[#allocation4 + $0x90] sm:$0xff]
    %v1928 = vld [vmem:[#allocation4 + $0x98] sm:$0xff]
    %v1929 = vld [vmem:[#allocation4 + $0xa0] sm:$0xff]
    %v1930 = vld [vmem:[#allocation4 + $0xa8] sm:$0xff]
    %v1931 = vld [vmem:[#allocation4 + $0xb0] sm:$0xff]
    %v1932 = vld [vmem:[#allocation4 + $0xb8] sm:$0xff]
    %v1933 = vld [vmem:[#allocation4 + $0xc0] sm:$0xff]
    %v1934 = vld [vmem:[#allocation4 + $0xc8] sm:$0xff]
    %v1935 = vld [vmem:[#allocation4 + $0xd0] sm:$0xff]
    %v1936 = vld [vmem:[#allocation4 + $0xd8] sm:$0xff]
    %v1937 = vld [vmem:[#allocation4 + $0xe0] sm:$0xff]
    %v1938 = vld [vmem:[#allocation4 + $0xe8] sm:$0xff]
    %v1939 = vld [vmem:[#allocation4 + $0xf0] sm:$0xff]
    %v1940 = vld [vmem:[#allocation4 + $0xf8] sm:$0xff]
    %v1941 = vld [vmem:[#allocation4 + $0x100] sm:$0xff]
    %v1942 = vld [vmem:[#allocation4 + $0x108] sm:$0xff]
    %v1943 = vld [vmem:[#allocation4 + $0x110] sm:$0xff]
    %v1944 = vld [vmem:[#allocation4 + $0x118] sm:$0xff]
    %v1945 = vld [vmem:[#allocation4 + $0x120] sm:$0xff]
    %v1946 = vld [vmem:[#allocation4 + $0x128] sm:$0xff]
    %v1947 = vld [vmem:[#allocation4 + $0x130] sm:$0xff]
    %v1948 = vld [vmem:[#allocation4 + $0x138] sm:$0xff]
    %v1949 = vld [vmem:[#allocation4 + $0x140] sm:$0xff]
    %v1950 = vld [vmem:[#allocation4 + $0x148] sm:$0xff]
    %v1951 = vld [vmem:[#allocation4 + $0x150] sm:$0xff]
    %v1952 = vld [vmem:[#allocation4 + $0x158] sm:$0xff]
    %v1953 = vld [vmem:[#allocation4 + $0x160] sm:$0xff]
    %v1954 = vld [vmem:[#allocation4 + $0x168] sm:$0xff]
    %v1955 = vld [vmem:[#allocation4 + $0x170] sm:$0xff]
    %v1956 = vld [vmem:[#allocation4 + $0x178] sm:$0xff]
    %v1957 = vld [vmem:[#allocation4 + $0x180] sm:$0xff]
    %v1958 = vld [vmem:[#allocation4 + $0x188] sm:$0xff]
    %v1959 = vld [vmem:[#allocation4 + $0x190] sm:$0xff]
    %v1960 = vld [vmem:[#allocation4 + $0x198] sm:$0xff]
    %v1961 = vld [vmem:[#allocation4 + $0x1a0] sm:$0xff]
    %v1962 = vld [vmem:[#allocation4 + $0x1a8] sm:$0xff]
    %v1963 = vld [vmem:[#allocation4 + $0x1b0] sm:$0xff]
    %v1964 = vld [vmem:[#allocation4 + $0x1b8] sm:$0xff]
    %v1965 = vld [vmem:[#allocation4 + $0x1c0] sm:$0xff]
    %v1966 = vld [vmem:[#allocation4 + $0x1c8] sm:$0xff]
    %v1967 = vld [vmem:[#allocation4 + $0x1d0] sm:$0xff]
    %v1968 = vld [vmem:[#allocation4 + $0x1d8] sm:$0xff]
    %v1969 = vld [vmem:[#allocation4 + $0x1e0] sm:$0xff]
    %v1970 = vld [vmem:[#allocation4 + $0x1e8] sm:$0xff]
    %v1971 = vld [vmem:[#allocation4 + $0x1f0] sm:$0xff]
    %v1972 = vld [vmem:[#allocation4 + $0x1f8] sm:$0xff]
    %v1973 = vld [vmem:[#allocation4 + $0x200] sm:$0xff]
    %v1974 = vld [vmem:[#allocation4 + $0x208] sm:$0xff]
    %v1975 = vld [vmem:[#allocation4 + $0x210] sm:$0xff]
    %v1976 = vld [vmem:[#allocation4 + $0x218] sm:$0xff]
    %v1977 = vld [vmem:[#allocation4 + $0x220] sm:$0xff]
    %v1978 = vld [vmem:[#allocation4 + $0x228] sm:$0xff]
    %v1979 = vld [vmem:[#allocation4 + $0x230] sm:$0xff]
    %v1980 = vld [vmem:[#allocation4 + $0x238] sm:$0xff]
    %v1981 = vld [vmem:[#allocation4 + $0x240] sm:$0xff]
    %v1982 = vld [vmem:[#allocation4 + $0x248] sm:$0xff]
    %v1983 = vld [vmem:[#allocation4 + $0x250] sm:$0xff]
    %v1984 = vld [vmem:[#allocation4 + $0x258] sm:$0xff]
    %v1985 = vld [vmem:[#allocation4 + $0x260] sm:$0xff]
    %v1986 = vld [vmem:[#allocation4 + $0x268] sm:$0xff]
    %v1987 = vld [vmem:[#allocation4 + $0x270] sm:$0xff]
    %v1988 = vld [vmem:[#allocation4 + $0x278] sm:$0xff]
    %v1989 = vld [vmem:[#allocation4 + $0x280] sm:$0xff]
    %v1990 = vld [vmem:[#allocation4 + $0x288] sm:$0xff]
    %v1991 = vld [vmem:[#allocation4 + $0x290] sm:$0xff]
    %v1992 = vld [vmem:[#allocation4 + $0x298] sm:$0xff]
    %v1993 = vld [vmem:[#allocation4 + $0x2a0] sm:$0xff]
    %v1994 = vld [vmem:[#allocation4 + $0x2a8] sm:$0xff]
    %v1995 = vld [vmem:[#allocation4 + $0x2b0] sm:$0xff]
    %v1996 = vld [vmem:[#allocation4 + $0x2b8] sm:$0xff]
    %v1997 = vld [vmem:[#allocation4 + $0x2c0] sm:$0xff]
    %v1998 = vld [vmem:[#allocation4 + $0x2c8] sm:$0xff]
    %v1999 = vld [vmem:[#allocation4 + $0x2d0] sm:$0xff]
    %v2000 = vld [vmem:[#allocation4 + $0x2d8] sm:$0xff]
    %v2001 = vld [vmem:[#allocation4 + $0x2e0] sm:$0xff]
    %v2002 = vld [vmem:[#allocation4 + $0x2e8] sm:$0xff]
    %v2003 = vld [vmem:[#allocation4 + $0x2f0] sm:$0xff]
    %v2004 = vld [vmem:[#allocation4 + $0x2f8] sm:$0xff]
    %v2005 = vld [vmem:[#allocation4 + $0x300] sm:$0xff]
    %v2006 = vld [vmem:[#allocation4 + $0x308] sm:$0xff]
    %v2007 = vld [vmem:[#allocation4 + $0x310] sm:$0xff]
    %v2008 = vld [vmem:[#allocation4 + $0x318] sm:$0xff]
    %v2009 = vld [vmem:[#allocation4 + $0x320] sm:$0xff]
    %v2010 = vld [vmem:[#allocation4 + $0x328] sm:$0xff]
    %v2011 = vld [vmem:[#allocation4 + $0x330] sm:$0xff]
    %v2012 = vld [vmem:[#allocation4 + $0x338] sm:$0xff]
    %v2013 = vld [vmem:[#allocation4 + $0x340] sm:$0xff]
    %v2014 = vld [vmem:[#allocation4 + $0x348] sm:$0xff]
    %v2015 = vld [vmem:[#allocation4 + $0x350] sm:$0xff]
    %v2016 = vld [vmem:[#allocation4 + $0x358] sm:$0xff]
    %v2017 = vld [vmem:[#allocation4 + $0x360] sm:$0xff]
    %v2018 = vld [vmem:[#allocation4 + $0x368] sm:$0xff]
    %v2019 = vld [vmem:[#allocation4 + $0x370] sm:$0xff]
    %v2020 = vld [vmem:[#allocation4 + $0x378] sm:$0xff]
    %v2021 = vld [vmem:[#allocation4 + $0x380] sm:$0xff]
    %v2022 = vld [vmem:[#allocation4 + $0x388] sm:$0xff]
    %v2023 = vld [vmem:[#allocation4 + $0x390] sm:$0xff]
    %v2024 = vld [vmem:[#allocation4 + $0x398] sm:$0xff]
    %v2025 = vld [vmem:[#allocation4 + $0x3a0] sm:$0xff]
    %v2026 = vld [vmem:[#allocation4 + $0x3a8] sm:$0xff]
    %v2027 = vld [vmem:[#allocation4 + $0x3b0] sm:$0xff]
    %v2028 = vld [vmem:[#allocation4 + $0x3b8] sm:$0xff]
    %v2029 = vld [vmem:[#allocation4 + $0x3c0] sm:$0xff]
    %v2030 = vld [vmem:[#allocation4 + $0x3c8] sm:$0xff]
    %v2031 = vld [vmem:[#allocation4 + $0x3d0] sm:$0xff]
    %v2032 = vld [vmem:[#allocation4 + $0x3d8] sm:$0xff]
    %v2033 = vld [vmem:[#allocation4 + $0x3e0] sm:$0xff]
    %v2034 = vld [vmem:[#allocation4 + $0x3e8] sm:$0xff]
    %v2035 = vld [vmem:[#allocation4 + $0x3f0] sm:$0xff]
    %v2036 = vld [vmem:[#allocation4 + $0x3f8] sm:$0xff]
    %v2037 = vld [vmem:[#allocation4 + $0x400] sm:$0xff]
    %v2038 = vld [vmem:[#allocation4 + $0x408] sm:$0xff]
    %v2039 = vld [vmem:[#allocation4 + $0x410] sm:$0xff]
    %v2040 = vld [vmem:[#allocation4 + $0x418] sm:$0xff]
    %v2041 = vld [vmem:[#allocation4 + $0x420] sm:$0xff]
    %v2042 = vld [vmem:[#allocation4 + $0x428] sm:$0xff]
    %v2043 = vld [vmem:[#allocation4 + $0x430] sm:$0xff]
    %v2044 = vld [vmem:[#allocation4 + $0x438] sm:$0xff]
    %v2045 = vld [vmem:[#allocation4 + $0x440] sm:$0xff]
    %v2046 = vld [vmem:[#allocation4 + $0x448] sm:$0xff]
    %v2047 = vld [vmem:[#allocation4 + $0x450] sm:$0xff]
    %v2048 = vld [vmem:[#allocation4 + $0x458] sm:$0xff]
    %v2049 = vld [vmem:[#allocation4 + $0x460] sm:$0xff]
    %v2050 = vld [vmem:[#allocation4 + $0x468] sm:$0xff]
    %v2051 = vld [vmem:[#allocation4 + $0x470] sm:$0xff]
    %v2052 = vld [vmem:[#allocation4 + $0x478] sm:$0xff]
    %v2197 = vunpack.c.l.b16 %v1909
    %v2198 = vunpack.c.h.b16 %v1909
    %v2199 = vunpack.c.l.b16 %v1910
    %v2200 = vunpack.c.h.b16 %v1910
    %v2201 = vunpack.c.l.b16 %v1911
    %v2202 = vunpack.c.h.b16 %v1911
    %v2203 = vunpack.c.l.b16 %v1912
    %v2204 = vunpack.c.h.b16 %v1912
    %v2205 = vunpack.c.l.b16 %v1913
    %v2206 = vunpack.c.h.b16 %v1913
    %v2207 = vunpack.c.l.b16 %v1914
    %v2208 = vunpack.c.h.b16 %v1914
    %v2209 = vunpack.c.l.b16 %v1915
    %v2210 = vunpack.c.h.b16 %v1915
    %v2211 = vunpack.c.l.b16 %v1916
    %v2212 = vunpack.c.h.b16 %v1916
    %v2213 = vunpack.c.l.b16 %v1917
    %v2214 = vunpack.c.h.b16 %v1917
    %v2215 = vunpack.c.l.b16 %v1918
    %v2216 = vunpack.c.h.b16 %v1918
    %v2217 = vunpack.c.l.b16 %v1919
    %v2218 = vunpack.c.h.b16 %v1919
    %v2219 = vunpack.c.l.b16 %v1920
    %v2220 = vunpack.c.h.b16 %v1920
    %v2221 = vunpack.c.l.b16 %v1921
    %v2222 = vunpack.c.h.b16 %v1921
    %v2223 = vunpack.c.l.b16 %v1922
    %v2224 = vunpack.c.h.b16 %v1922
    %v2225 = vunpack.c.l.b16 %v1923
    %v2226 = vunpack.c.h.b16 %v1923
    %v2227 = vunpack.c.l.b16 %v1924
    %v2228 = vunpack.c.h.b16 %v1924
    %v2229 = vunpack.c.l.b16 %v1925
    %v2230 = vunpack.c.h.b16 %v1925
    %v2231 = vunpack.c.l.b16 %v1926
    %v2232 = vunpack.c.h.b16 %v1926
    %v2233 = vunpack.c.l.b16 %v1927
    %v2234 = vunpack.c.h.b16 %v1927
    %v2235 = vunpack.c.l.b16 %v1928
    %v2236 = vunpack.c.h.b16 %v1928
    %v2237 = vunpack.c.l.b16 %v1929
    %v2238 = vunpack.c.h.b16 %v1929
    %v2239 = vunpack.c.l.b16 %v1930
    %v2240 = vunpack.c.h.b16 %v1930
    %v2241 = vunpack.c.l.b16 %v1931
    %v2242 = vunpack.c.h.b16 %v1931
    %v2243 = vunpack.c.l.b16 %v1932
    %v2244 = vunpack.c.h.b16 %v1932
    %v2245 = vunpack.c.l.b16 %v1933
    %v2246 = vunpack.c.h.b16 %v1933
    %v2247 = vunpack.c.l.b16 %v1934
    %v2248 = vunpack.c.h.b16 %v1934
    %v2249 = vunpack.c.l.b16 %v1935
    %v2250 = vunpack.c.h.b16 %v1935
    %v2251 = vunpack.c.l.b16 %v1936
    %v2252 = vunpack.c.h.b16 %v1936
    %v2253 = vunpack.c.l.b16 %v1937
    %v2254 = vunpack.c.h.b16 %v1937
    %v2255 = vunpack.c.l.b16 %v1938
    %v2256 = vunpack.c.h.b16 %v1938
    %v2257 = vunpack.c.l.b16 %v1939
    %v2258 = vunpack.c.h.b16 %v1939
    %v2259 = vunpack.c.l.b16 %v1940
    %v2260 = vunpack.c.h.b16 %v1940
    %v2261 = vunpack.c.l.b16 %v1941
    %v2262 = vunpack.c.h.b16 %v1941
    %v2263 = vunpack.c.l.b16 %v1942
    %v2264 = vunpack.c.h.b16 %v1942
    %v2265 = vunpack.c.l.b16 %v1943
    %v2266 = vunpack.c.h.b16 %v1943
    %v2267 = vunpack.c.l.b16 %v1944
    %v2268 = vunpack.c.h.b16 %v1944
    %v2269 = vunpack.c.l.b16 %v1945
    %v2270 = vunpack.c.h.b16 %v1945
    %v2271 = vunpack.c.l.b16 %v1946
    %v2272 = vunpack.c.h.b16 %v1946
    %v2273 = vunpack.c.l.b16 %v1947
    %v2274 = vunpack.c.h.b16 %v1947
    %v2275 = vunpack.c.l.b16 %v1948
    %v2276 = vunpack.c.h.b16 %v1948
    %v2277 = vunpack.c.l.b16 %v1949
    %v2278 = vunpack.c.h.b16 %v1949
    %v2279 = vunpack.c.l.b16 %v1950
    %v2280 = vunpack.c.h.b16 %v1950
    %v2281 = vunpack.c.l.b16 %v1951
    %v2282 = vunpack.c.h.b16 %v1951
    %v2283 = vunpack.c.l.b16 %v1952
    %v2284 = vunpack.c.h.b16 %v1952
    %v2285 = vunpack.c.l.b16 %v1953
    %v2286 = vunpack.c.h.b16 %v1953
    %v2287 = vunpack.c.l.b16 %v1954
    %v2288 = vunpack.c.h.b16 %v1954
    %v2289 = vunpack.c.l.b16 %v1955
    %v2290 = vunpack.c.h.b16 %v1955
    %v2291 = vunpack.c.l.b16 %v1956
    %v2292 = vunpack.c.h.b16 %v1956
    %v2293 = vunpack.c.l.b16 %v1957
    %v2294 = vunpack.c.h.b16 %v1957
    %v2295 = vunpack.c.l.b16 %v1958
    %v2296 = vunpack.c.h.b16 %v1958
    %v2297 = vunpack.c.l.b16 %v1959
    %v2298 = vunpack.c.h.b16 %v1959
    %v2299 = vunpack.c.l.b16 %v1960
    %v2300 = vunpack.c.h.b16 %v1960
    %v2301 = vunpack.c.l.b16 %v1961
    %v2302 = vunpack.c.h.b16 %v1961
    %v2303 = vunpack.c.l.b16 %v1962
    %v2304 = vunpack.c.h.b16 %v1962
    %v2305 = vunpack.c.l.b16 %v1963
    %v2306 = vunpack.c.h.b16 %v1963
    %v2307 = vunpack.c.l.b16 %v1964
    %v2308 = vunpack.c.h.b16 %v1964
    %v2309 = vunpack.c.l.b16 %v1965
    %v2310 = vunpack.c.h.b16 %v1965
    %v2311 = vunpack.c.l.b16 %v1966
    %v2312 = vunpack.c.h.b16 %v1966
    %v2313 = vunpack.c.l.b16 %v1967
    %v2314 = vunpack.c.h.b16 %v1967
    %v2315 = vunpack.c.l.b16 %v1968
    %v2316 = vunpack.c.h.b16 %v1968
    %v2317 = vunpack.c.l.b16 %v1969
    %v2318 = vunpack.c.h.b16 %v1969
    %v2319 = vunpack.c.l.b16 %v1970
    %v2320 = vunpack.c.h.b16 %v1970
    %v2321 = vunpack.c.l.b16 %v1971
    %v2322 = vunpack.c.h.b16 %v1971
    %v2323 = vunpack.c.l.b16 %v1972
    %v2324 = vunpack.c.h.b16 %v1972
    %v2325 = vunpack.c.l.b16 %v1973
    %v2326 = vunpack.c.h.b16 %v1973
    %v2327 = vunpack.c.l.b16 %v1974
    %v2328 = vunpack.c.h.b16 %v1974
    %v2329 = vunpack.c.l.b16 %v1975
    %v2330 = vunpack.c.h.b16 %v1975
    %v2331 = vunpack.c.l.b16 %v1976
    %v2332 = vunpack.c.h.b16 %v1976
    %v2333 = vunpack.c.l.b16 %v1977
    %v2334 = vunpack.c.h.b16 %v1977
    %v2335 = vunpack.c.l.b16 %v1978
    %v2336 = vunpack.c.h.b16 %v1978
    %v2337 = vunpack.c.l.b16 %v1979
    %v2338 = vunpack.c.h.b16 %v1979
    %v2339 = vunpack.c.l.b16 %v1980
    %v2340 = vunpack.c.h.b16 %v1980
    %v2341 = vunpack.c.l.b16 %v1981
    %v2342 = vunpack.c.h.b16 %v1981
    %v2343 = vunpack.c.l.b16 %v1982
    %v2344 = vunpack.c.h.b16 %v1982
    %v2345 = vunpack.c.l.b16 %v1983
    %v2346 = vunpack.c.h.b16 %v1983
    %v2347 = vunpack.c.l.b16 %v1984
    %v2348 = vunpack.c.h.b16 %v1984
    %v2349 = vunpack.c.l.b16 %v1985
    %v2350 = vunpack.c.h.b16 %v1985
    %v2351 = vunpack.c.l.b16 %v1986
    %v2352 = vunpack.c.h.b16 %v1986
    %v2353 = vunpack.c.l.b16 %v1987
    %v2354 = vunpack.c.h.b16 %v1987
    %v2355 = vunpack.c.l.b16 %v1988
    %v2356 = vunpack.c.h.b16 %v1988
    %v2357 = vunpack.c.l.b16 %v1989
    %v2358 = vunpack.c.h.b16 %v1989
    %v2359 = vunpack.c.l.b16 %v1990
    %v2360 = vunpack.c.h.b16 %v1990
    %v2361 = vunpack.c.l.b16 %v1991
    %v2362 = vunpack.c.h.b16 %v1991
    %v2363 = vunpack.c.l.b16 %v1992
    %v2364 = vunpack.c.h.b16 %v1992
    %v2365 = vunpack.c.l.b16 %v1993
    %v2366 = vunpack.c.h.b16 %v1993
    %v2367 = vunpack.c.l.b16 %v1994
    %v2368 = vunpack.c.h.b16 %v1994
    %v2369 = vunpack.c.l.b16 %v1995
    %v2370 = vunpack.c.h.b16 %v1995
    %v2371 = vunpack.c.l.b16 %v1996
    %v2372 = vunpack.c.h.b16 %v1996
    %v2373 = vunpack.c.l.b16 %v1997
    %v2374 = vunpack.c.h.b16 %v1997
    %v2375 = vunpack.c.l.b16 %v1998
    %v2376 = vunpack.c.h.b16 %v1998
    %v2377 = vunpack.c.l.b16 %v1999
    %v2378 = vunpack.c.h.b16 %v1999
    %v2379 = vunpack.c.l.b16 %v2000
    %v2380 = vunpack.c.h.b16 %v2000
    %v2381 = vunpack.c.l.b16 %v2001
    %v2382 = vunpack.c.h.b16 %v2001
    %v2383 = vunpack.c.l.b16 %v2002
    %v2384 = vunpack.c.h.b16 %v2002
    %v2385 = vunpack.c.l.b16 %v2003
    %v2386 = vunpack.c.h.b16 %v2003
    %v2387 = vunpack.c.l.b16 %v2004
    %v2388 = vunpack.c.h.b16 %v2004
    %v2389 = vunpack.c.l.b16 %v2005
    %v2390 = vunpack.c.h.b16 %v2005
    %v2391 = vunpack.c.l.b16 %v2006
    %v2392 = vunpack.c.h.b16 %v2006
    %v2393 = vunpack.c.l.b16 %v2007
    %v2394 = vunpack.c.h.b16 %v2007
    %v2395 = vunpack.c.l.b16 %v2008
    %v2396 = vunpack.c.h.b16 %v2008
    %v2397 = vunpack.c.l.b16 %v2009
    %v2398 = vunpack.c.h.b16 %v2009
    %v2399 = vunpack.c.l.b16 %v2010
    %v2400 = vunpack.c.h.b16 %v2010
    %v2401 = vunpack.c.l.b16 %v2011
    %v2402 = vunpack.c.h.b16 %v2011
    %v2403 = vunpack.c.l.b16 %v2012
    %v2404 = vunpack.c.h.b16 %v2012
    %v2405 = vunpack.c.l.b16 %v2013
    %v2406 = vunpack.c.h.b16 %v2013
    %v2407 = vunpack.c.l.b16 %v2014
    %v2408 = vunpack.c.h.b16 %v2014
    %v2409 = vunpack.c.l.b16 %v2015
    %v2410 = vunpack.c.h.b16 %v2015
    %v2411 = vunpack.c.l.b16 %v2016
    %v2412 = vunpack.c.h.b16 %v2016
    %v2413 = vunpack.c.l.b16 %v2017
    %v2414 = vunpack.c.h.b16 %v2017
    %v2415 = vunpack.c.l.b16 %v2018
    %v2416 = vunpack.c.h.b16 %v2018
    %v2417 = vunpack.c.l.b16 %v2019
    %v2418 = vunpack.c.h.b16 %v2019
    %v2419 = vunpack.c.l.b16 %v2020
    %v2420 = vunpack.c.h.b16 %v2020
    %v2421 = vunpack.c.l.b16 %v2021
    %v2422 = vunpack.c.h.b16 %v2021
    %v2423 = vunpack.c.l.b16 %v2022
    %v2424 = vunpack.c.h.b16 %v2022
    %v2425 = vunpack.c.l.b16 %v2023
    %v2426 = vunpack.c.h.b16 %v2023
    %v2427 = vunpack.c.l.b16 %v2024
    %v2428 = vunpack.c.h.b16 %v2024
    %v2429 = vunpack.c.l.b16 %v2025
    %v2430 = vunpack.c.h.b16 %v2025
    %v2431 = vunpack.c.l.b16 %v2026
    %v2432 = vunpack.c.h.b16 %v2026
    %v2433 = vunpack.c.l.b16 %v2027
    %v2434 = vunpack.c.h.b16 %v2027
    %v2435 = vunpack.c.l.b16 %v2028
    %v2436 = vunpack.c.h.b16 %v2028
    %v2437 = vunpack.c.l.b16 %v2029
    %v2438 = vunpack.c.h.b16 %v2029
    %v2439 = vunpack.c.l.b16 %v2030
    %v2440 = vunpack.c.h.b16 %v2030
    %v2441 = vunpack.c.l.b16 %v2031
    %v2442 = vunpack.c.h.b16 %v2031
    %v2443 = vunpack.c.l.b16 %v2032
    %v2444 = vunpack.c.h.b16 %v2032
    %v2445 = vunpack.c.l.b16 %v2033
    %v2446 = vunpack.c.h.b16 %v2033
    %v2447 = vunpack.c.l.b16 %v2034
    %v2448 = vunpack.c.h.b16 %v2034
    %v2449 = vunpack.c.l.b16 %v2035
    %v2450 = vunpack.c.h.b16 %v2035
    %v2451 = vunpack.c.l.b16 %v2036
    %v2452 = vunpack.c.h.b16 %v2036
    %v2453 = vunpack.c.l.b16 %v2037
    %v2454 = vunpack.c.h.b16 %v2037
    %v2455 = vunpack.c.l.b16 %v2038
    %v2456 = vunpack.c.h.b16 %v2038
    %v2457 = vunpack.c.l.b16 %v2039
    %v2458 = vunpack.c.h.b16 %v2039
    %v2459 = vunpack.c.l.b16 %v2040
    %v2460 = vunpack.c.h.b16 %v2040
    %v2461 = vunpack.c.l.b16 %v2041
    %v2462 = vunpack.c.h.b16 %v2041
    %v2463 = vunpack.c.l.b16 %v2042
    %v2464 = vunpack.c.h.b16 %v2042
    %v2465 = vunpack.c.l.b16 %v2043
    %v2466 = vunpack.c.h.b16 %v2043
    %v2467 = vunpack.c.l.b16 %v2044
    %v2468 = vunpack.c.h.b16 %v2044
    %v2469 = vunpack.c.l.b16 %v2045
    %v2470 = vunpack.c.h.b16 %v2045
    %v2471 = vunpack.c.l.b16 %v2046
    %v2472 = vunpack.c.h.b16 %v2046
    %v2473 = vunpack.c.l.b16 %v2047
    %v2474 = vunpack.c.h.b16 %v2047
    %v2475 = vunpack.c.l.b16 %v2048
    %v2476 = vunpack.c.h.b16 %v2048
    %v2477 = vunpack.c.l.b16 %v2049
    %v2478 = vunpack.c.h.b16 %v2049
    %v2479 = vunpack.c.l.b16 %v2050
    %v2480 = vunpack.c.h.b16 %v2050
    %v2481 = vunpack.c.l.b16 %v2051
    %v2482 = vunpack.c.h.b16 %v2051
    %v2483 = vunpack.c.l.b16 %v2052
    %v2484 = vunpack.c.h.b16 %v2052
    %v2485 = vpack.c.b16 %v2203, %v2197
    %v2486 = vpack.c.b16 %v2204, %v2198
    %v2487 = vpack.c.b16 %v2205, %v2199
    %v2488 = vpack.c.b16 %v2206, %v2200
    %v2489 = vpack.c.b16 %v2207, %v2201
    %v2490 = vpack.c.b16 %v2208, %v2202
    %v2491 = vpack.c.b16 %v2215, %v2209
    %v2492 = vpack.c.b16 %v2216, %v2210
    %v2493 = vpack.c.b16 %v2217, %v2211
    %v2494 = vpack.c.b16 %v2218, %v2212
    %v2495 = vpack.c.b16 %v2219, %v2213
    %v2496 = vpack.c.b16 %v2220, %v2214
    %v2497 = vpack.c.b16 %v2227, %v2221
    %v2498 = vpack.c.b16 %v2228, %v2222
    %v2499 = vpack.c.b16 %v2229, %v2223
    %v2500 = vpack.c.b16 %v2230, %v2224
    %v2501 = vpack.c.b16 %v2231, %v2225
    %v2502 = vpack.c.b16 %v2232, %v2226
    %v2503 = vpack.c.b16 %v2239, %v2233
    %v2504 = vpack.c.b16 %v2240, %v2234
    %v2505 = vpack.c.b16 %v2241, %v2235
    %v2506 = vpack.c.b16 %v2242, %v2236
    %v2507 = vpack.c.b16 %v2243, %v2237
    %v2508 = vpack.c.b16 %v2244, %v2238
    %v2509 = vpack.c.b16 %v2251, %v2245
    %v2510 = vpack.c.b16 %v2252, %v2246
    %v2511 = vpack.c.b16 %v2253, %v2247
    %v2512 = vpack.c.b16 %v2254, %v2248
    %v2513 = vpack.c.b16 %v2255, %v2249
    %v2514 = vpack.c.b16 %v2256, %v2250
    %v2515 = vpack.c.b16 %v2263, %v2257
    %v2516 = vpack.c.b16 %v2264, %v2258
    %v2517 = vpack.c.b16 %v2265, %v2259
    %v2518 = vpack.c.b16 %v2266, %v2260
    %v2519 = vpack.c.b16 %v2267, %v2261
    %v2520 = vpack.c.b16 %v2268, %v2262
    %v2521 = vpack.c.b16 %v2275, %v2269
    %v2522 = vpack.c.b16 %v2276, %v2270
    %v2523 = vpack.c.b16 %v2277, %v2271
    %v2524 = vpack.c.b16 %v2278, %v2272
    %v2525 = vpack.c.b16 %v2279, %v2273
    %v2526 = vpack.c.b16 %v2280, %v2274
    %v2527 = vpack.c.b16 %v2287, %v2281
    %v2528 = vpack.c.b16 %v2288, %v2282
    %v2529 = vpack.c.b16 %v2289, %v2283
    %v2530 = vpack.c.b16 %v2290, %v2284
    %v2531 = vpack.c.b16 %v2291, %v2285
    %v2532 = vpack.c.b16 %v2292, %v2286
    %v2533 = vpack.c.b16 %v2299, %v2293
    %v2534 = vpack.c.b16 %v2300, %v2294
    %v2535 = vpack.c.b16 %v2301, %v2295
    %v2536 = vpack.c.b16 %v2302, %v2296
    %v2537 = vpack.c.b16 %v2303, %v2297
    %v2538 = vpack.c.b16 %v2304, %v2298
    %v2539 = vpack.c.b16 %v2311, %v2305
    %v2540 = vpack.c.b16 %v2312, %v2306
    %v2541 = vpack.c.b16 %v2313, %v2307
    %v2542 = vpack.c.b16 %v2314, %v2308
    %v2543 = vpack.c.b16 %v2315, %v2309
    %v2544 = vpack.c.b16 %v2316, %v2310
    %v2545 = vpack.c.b16 %v2323, %v2317
    %v2546 = vpack.c.b16 %v2324, %v2318
    %v2547 = vpack.c.b16 %v2325, %v2319
    %v2548 = vpack.c.b16 %v2326, %v2320
    %v2549 = vpack.c.b16 %v2327, %v2321
    %v2550 = vpack.c.b16 %v2328, %v2322
    %v2551 = vpack.c.b16 %v2335, %v2329
    %v2552 = vpack.c.b16 %v2336, %v2330
    %v2553 = vpack.c.b16 %v2337, %v2331
    %v2554 = vpack.c.b16 %v2338, %v2332
    %v2555 = vpack.c.b16 %v2339, %v2333
    %v2556 = vpack.c.b16 %v2340, %v2334
    %v2557 = vpack.c.b16 %v2347, %v2341
    %v2558 = vpack.c.b16 %v2348, %v2342
    %v2559 = vpack.c.b16 %v2349, %v2343
    %v2560 = vpack.c.b16 %v2350, %v2344
    %v2561 = vpack.c.b16 %v2351, %v2345
    %v2562 = vpack.c.b16 %v2352, %v2346
    %v2563 = vpack.c.b16 %v2359, %v2353
    %v2564 = vpack.c.b16 %v2360, %v2354
    %v2565 = vpack.c.b16 %v2361, %v2355
    %v2566 = vpack.c.b16 %v2362, %v2356
    %v2567 = vpack.c.b16 %v2363, %v2357
    %v2568 = vpack.c.b16 %v2364, %v2358
    %v2569 = vpack.c.b16 %v2371, %v2365
    %v2570 = vpack.c.b16 %v2372, %v2366
    %v2571 = vpack.c.b16 %v2373, %v2367
    %v2572 = vpack.c.b16 %v2374, %v2368
    %v2573 = vpack.c.b16 %v2375, %v2369
    %v2574 = vpack.c.b16 %v2376, %v2370
    %v2575 = vpack.c.b16 %v2383, %v2377
    %v2576 = vpack.c.b16 %v2384, %v2378
    %v2577 = vpack.c.b16 %v2385, %v2379
    %v2578 = vpack.c.b16 %v2386, %v2380
    %v2579 = vpack.c.b16 %v2387, %v2381
    %v2580 = vpack.c.b16 %v2388, %v2382
    %v2581 = vpack.c.b16 %v2395, %v2389
    %v2582 = vpack.c.b16 %v2396, %v2390
    %v2583 = vpack.c.b16 %v2397, %v2391
    %v2584 = vpack.c.b16 %v2398, %v2392
    %v2585 = vpack.c.b16 %v2399, %v2393
    %v2586 = vpack.c.b16 %v2400, %v2394
    %v2587 = vpack.c.b16 %v2407, %v2401
    %v2588 = vpack.c.b16 %v2408, %v2402
    %v2589 = vpack.c.b16 %v2409, %v2403
    %v2590 = vpack.c.b16 %v2410, %v2404
    %v2591 = vpack.c.b16 %v2411, %v2405
    %v2592 = vpack.c.b16 %v2412, %v2406
    %v2593 = vpack.c.b16 %v2419, %v2413
    %v2594 = vpack.c.b16 %v2420, %v2414
    %v2595 = vpack.c.b16 %v2421, %v2415
    %v2596 = vpack.c.b16 %v2422, %v2416
    %v2597 = vpack.c.b16 %v2423, %v2417
    %v2598 = vpack.c.b16 %v2424, %v2418
    %v2599 = vpack.c.b16 %v2431, %v2425
    %v2600 = vpack.c.b16 %v2432, %v2426
    %v2601 = vpack.c.b16 %v2433, %v2427
    %v2602 = vpack.c.b16 %v2434, %v2428
    %v2603 = vpack.c.b16 %v2435, %v2429
    %v2604 = vpack.c.b16 %v2436, %v2430
    %v2605 = vpack.c.b16 %v2443, %v2437
    %v2606 = vpack.c.b16 %v2444, %v2438
    %v2607 = vpack.c.b16 %v2445, %v2439
    %v2608 = vpack.c.b16 %v2446, %v2440
    %v2609 = vpack.c.b16 %v2447, %v2441
    %v2610 = vpack.c.b16 %v2448, %v2442
    %v2611 = vpack.c.b16 %v2455, %v2449
    %v2612 = vpack.c.b16 %v2456, %v2450
    %v2613 = vpack.c.b16 %v2457, %v2451
    %v2614 = vpack.c.b16 %v2458, %v2452
    %v2615 = vpack.c.b16 %v2459, %v2453
    %v2616 = vpack.c.b16 %v2460, %v2454
    %v2617 = vpack.c.b16 %v2467, %v2461
    %v2618 = vpack.c.b16 %v2468, %v2462
    %v2619 = vpack.c.b16 %v2469, %v2463
    %v2620 = vpack.c.b16 %v2470, %v2464
    %v2621 = vpack.c.b16 %v2471, %v2465
    %v2622 = vpack.c.b16 %v2472, %v2466
    %v2623 = vpack.c.b16 %v2479, %v2473
    %v2624 = vpack.c.b16 %v2480, %v2474
    %v2625 = vpack.c.b16 %v2481, %v2475
    %v2626 = vpack.c.b16 %v2482, %v2476
    %v2627 = vpack.c.b16 %v2483, %v2477
    %v2628 = vpack.c.b16 %v2484, %v2478
    %2773 = vmatprep.subr.bf16.mxu0 %v2486
    %2774 = vmatpush1.bf16.msra.mxu0 %v2485
    %2775 = vmatprep.subr.bf16.mxu0 %v2492
    %2776 = vmatpush1.bf16.msra.mxu0 %v2491
    %2777 = vmatprep.subr.bf16.mxu0 %v2498
    %2778 = vmatpush1.bf16.msra.mxu0 %v2497
    %2779 = vmatprep.subr.bf16.mxu0 %v2504
    %2780 = vmatpush1.bf16.msra.mxu0 %v2503
    %2781 = vmatprep.subr.bf16.mxu0 %v2510
    %2782 = vmatpush1.bf16.msra.mxu0 %v2509
    %2783 = vmatprep.subr.bf16.mxu0 %v2516
    %2784 = vmatpush1.bf16.msra.mxu0 %v2515
    %2785 = vmatprep.subr.bf16.mxu0 %v2522
    %2786 = vmatpush1.bf16.msra.mxu0 %v2521
    %2787 = vmatprep.subr.bf16.mxu0 %v2528
    %2788 = vmatpush1.bf16.msra.mxu0 %v2527
    %2789 = vmatprep.subr.bf16.mxu0 %v2534
    %2790 = vmatpush1.bf16.msra.mxu0 %v2533
    %2791 = vmatprep.subr.bf16.mxu0 %v2540
    %2792 = vmatpush1.bf16.msra.mxu0 %v2539
    %2793 = vmatprep.subr.bf16.mxu0 %v2546
    %2794 = vmatpush1.bf16.msra.mxu0 %v2545
    %2795 = vmatprep.subr.bf16.mxu0 %v2552
    %2796 = vmatpush1.bf16.msra.mxu0 %v2551
    %2797 = vmatprep.subr.bf16.mxu0 %v2558
    %2798 = vmatpush1.bf16.msra.mxu0 %v2557
    %2799 = vmatprep.subr.bf16.mxu0 %v2564
    %2800 = vmatpush1.bf16.msra.mxu0 %v2563
    %2801 = vmatprep.subr.bf16.mxu0 %v2570
    %2802 = vmatpush1.bf16.msra.mxu0 %v2569
    %2803 = vmatprep.subr.bf16.mxu0 %v2576
    %2804 = vmatpush1.bf16.msra.mxu0 %v2575
    %2805 = vmatprep.mubr.bf16.mxu0 %v1907
    %2806 = vmatmul.mubr.bf16.gmra.mrb[0].mxu0 %v1906
    %v2807 = vpop.f32.mrb[0].mxu0
    %v2808 = vadd.f32 0.0, %v2807
    %v2809 = vpop.f32.mrb[0].mxu0
    %v2810 = vadd.f32 0.0, %v2809
    %v2811 = vpop.f32.mrb[0].mxu0
    %v2812 = vpop.f32.mrb[0].mxu0
    %2813 = vdwg.mxu0
    %2814 = vmatprep.subr.bf16.mxu0 %v2582
    %2815 = vmatpush1.bf16.msra.mxu0 %v2581
    %2816 = vmatprep.subr.bf16.mxu0 %v2588
    %2817 = vmatpush1.bf16.msra.mxu0 %v2587
    %2818 = vmatprep.subr.bf16.mxu0 %v2594
    %2819 = vmatpush1.bf16.msra.mxu0 %v2593
    %2820 = vmatprep.subr.bf16.mxu0 %v2600
    %2821 = vmatpush1.bf16.msra.mxu0 %v2599
    %2822 = vmatprep.subr.bf16.mxu0 %v2606
    %2823 = vmatpush1.bf16.msra.mxu0 %v2605
    %2824 = vmatprep.subr.bf16.mxu0 %v2612
    %2825 = vmatpush1.bf16.msra.mxu0 %v2611
    %2826 = vmatprep.subr.bf16.mxu0 %v2618
    %2827 = vmatpush1.bf16.msra.mxu0 %v2617
    %2828 = vmatprep.subr.bf16.mxu0 %v2624
    %2829 = vmatpush1.bf16.msra.mxu0 %v2623
    %2830 = vmatprep.subr.bf16.mxu0 0
    %2831 = vmatpush1.bf16.msra.mxu0 0
    %2832 = vmatprep.subr.bf16.mxu0 0
    %2833 = vmatpush1.bf16.msra.mxu0 0
    %2834 = vmatprep.subr.bf16.mxu0 0
    %2835 = vmatpush1.bf16.msra.mxu0 0
    %2836 = vmatprep.subr.bf16.mxu0 0
    %2837 = vmatpush1.bf16.msra.mxu0 0
    %2838 = vmatprep.subr.bf16.mxu0 0
    %2839 = vmatpush1.bf16.msra.mxu0 0
    %2840 = vmatprep.subr.bf16.mxu0 0
    %2841 = vmatpush1.bf16.msra.mxu0 0
    %2842 = vmatprep.subr.bf16.mxu0 0
    %2843 = vmatpush1.bf16.msra.mxu0 0
    %2844 = vmatprep.subr.bf16.mxu0 0
    %2845 = vmatpush1.bf16.msra.mxu0 0
    %2846 = vmatprep.mubr.bf16.mxu0 0
    %2847 = vmatmul.mubr.bf16.gmra.mrb[0].mxu0 %v1908
    %v2848 = vpop.f32.mrb[0].mxu0
    %v2849 = vadd.f32 %v2808, %v2848
    %v2850 = vpop.f32.mrb[0].mxu0
    %v2851 = vadd.f32 %v2810, %v2850
    %v2852 = vpop.f32.mrb[0].mxu0
    %v2853 = vpop.f32.mrb[0].mxu0
    %2854 = vdwg.mxu0
    %2855 = vmatprep.subr.bf16.mxu0 %v2488
    %2856 = vmatpush1.bf16.msra.mxu0 %v2487
    %2857 = vmatprep.subr.bf16.mxu0 %v2494
    %2858 = vmatpush1.bf16.msra.mxu0 %v2493
    %2859 = vmatprep.subr.bf16.mxu0 %v2500
    %2860 = vmatpush1.bf16.msra.mxu0 %v2499
    %2861 = vmatprep.subr.bf16.mxu0 %v2506
    %2862 = vmatpush1.bf16.msra.mxu0 %v2505
    %2863 = vmatprep.subr.bf16.mxu0 %v2512
    %2864 = vmatpush1.bf16.msra.mxu0 %v2511
    %2865 = vmatprep.subr.bf16.mxu0 %v2518
    %2866 = vmatpush1.bf16.msra.mxu0 %v2517
    %2867 = vmatprep.subr.bf16.mxu0 %v2524
    %2868 = vmatpush1.bf16.msra.mxu0 %v2523
    %2869 = vmatprep.subr.bf16.mxu0 %v2530
    %2870 = vmatpush1.bf16.msra.mxu0 %v2529
    %2871 = vmatprep.subr.bf16.mxu0 %v2536
    %2872 = vmatpush1.bf16.msra.mxu0 %v2535
    %2873 = vmatprep.subr.bf16.mxu0 %v2542
    %2874 = vmatpush1.bf16.msra.mxu0 %v2541
    %2875 = vmatprep.subr.bf16.mxu0 %v2548
    %2876 = vmatpush1.bf16.msra.mxu0 %v2547
    %2877 = vmatprep.subr.bf16.mxu0 %v2554
    %2878 = vmatpush1.bf16.msra.mxu0 %v2553
    %2879 = vmatprep.subr.bf16.mxu0 %v2560
    %2880 = vmatpush1.bf16.msra.mxu0 %v2559
    %2881 = vmatprep.subr.bf16.mxu0 %v2566
    %2882 = vmatpush1.bf16.msra.mxu0 %v2565
    %2883 = vmatprep.subr.bf16.mxu0 %v2572
    %2884 = vmatpush1.bf16.msra.mxu0 %v2571
    %2885 = vmatprep.subr.bf16.mxu0 %v2578
    %2886 = vmatpush1.bf16.msra.mxu0 %v2577
    %2887 = vmatprep.mubr.bf16.mxu0 %v1907
    %2888 = vmatmul.mubr.bf16.gmra.mrb[0].mxu0 %v1906
    %v2889 = vpop.f32.mrb[0].mxu0
    %v2890 = vadd.f32 0.0, %v2889
    %v2891 = vpop.f32.mrb[0].mxu0
    %v2892 = vadd.f32 0.0, %v2891
    %v2893 = vpop.f32.mrb[0].mxu0
    %v2894 = vpop.f32.mrb[0].mxu0
    %2895 = vdwg.mxu0
    %2896 = vmatprep.subr.bf16.mxu0 %v2584
    %2897 = vmatpush1.bf16.msra.mxu0 %v2583
    %2898 = vmatprep.subr.bf16.mxu0 %v2590
    %2899 = vmatpush1.bf16.msra.mxu0 %v2589
    %2900 = vmatprep.subr.bf16.mxu0 %v2596
    %2901 = vmatpush1.bf16.msra.mxu0 %v2595
    %2902 = vmatprep.subr.bf16.mxu0 %v2602
    %2903 = vmatpush1.bf16.msra.mxu0 %v2601
    %2904 = vmatprep.subr.bf16.mxu0 %v2608
    %2905 = vmatpush1.bf16.msra.mxu0 %v2607
    %2906 = vmatprep.subr.bf16.mxu0 %v2614
    %2907 = vmatpush1.bf16.msra.mxu0 %v2613
    %2908 = vmatprep.subr.bf16.mxu0 %v2620
    %2909 = vmatpush1.bf16.msra.mxu0 %v2619
    %2910 = vmatprep.subr.bf16.mxu0 %v2626
    %2911 = vmatpush1.bf16.msra.mxu0 %v2625
    %2912 = vmatprep.subr.bf16.mxu0 0
    %2913 = vmatpush1.bf16.msra.mxu0 0
    %2914 = vmatprep.subr.bf16.mxu0 0
    %2915 = vmatpush1.bf16.msra.mxu0 0
    %2916 = vmatprep.subr.bf16.mxu0 0
    %2917 = vmatpush1.bf16.msra.mxu0 0
    %2918 = vmatprep.subr.bf16.mxu0 0
    %2919 = vmatpush1.bf16.msra.mxu0 0
    %2920 = vmatprep.subr.bf16.mxu0 0
    %2921 = vmatpush1.bf16.msra.mxu0 0
    %2922 = vmatprep.subr.bf16.mxu0 0
    %2923 = vmatpush1.bf16.msra.mxu0 0
    %2924 = vmatprep.subr.bf16.mxu0 0
    %2925 = vmatpush1.bf16.msra.mxu0 0
    %2926 = vmatprep.subr.bf16.mxu0 0
    %2927 = vmatpush1.bf16.msra.mxu0 0
    %2928 = vmatprep.mubr.bf16.mxu0 0
    %2929 = vmatmul.mubr.bf16.gmra.mrb[0].mxu0 %v1908
    %v2930 = vpop.f32.mrb[0].mxu0
    %v2931 = vadd.f32 %v2890, %v2930
    %v2932 = vpop.f32.mrb[0].mxu0
    %v2933 = vadd.f32 %v2892, %v2932
    %v2934 = vpop.f32.mrb[0].mxu0
    %v2935 = vpop.f32.mrb[0].mxu0
    %2936 = vdwg.mxu0
    %2937 = vmatprep.subr.bf16.mxu0 %v2490
    %2938 = vmatpush1.bf16.msra.mxu0 %v2489
    %2939 = vmatprep.subr.bf16.mxu0 %v2496
    %2940 = vmatpush1.bf16.msra.mxu0 %v2495
    %2941 = vmatprep.subr.bf16.mxu0 %v2502
    %2942 = vmatpush1.bf16.msra.mxu0 %v2501
    %2943 = vmatprep.subr.bf16.mxu0 %v2508
    %2944 = vmatpush1.bf16.msra.mxu0 %v2507
    %2945 = vmatprep.subr.bf16.mxu0 %v2514
    %2946 = vmatpush1.bf16.msra.mxu0 %v2513
    %2947 = vmatprep.subr.bf16.mxu0 %v2520
    %2948 = vmatpush1.bf16.msra.mxu0 %v2519
    %2949 = vmatprep.subr.bf16.mxu0 %v2526
    %2950 = vmatpush1.bf16.msra.mxu0 %v2525
    %2951 = vmatprep.subr.bf16.mxu0 %v2532
    %2952 = vmatpush1.bf16.msra.mxu0 %v2531
    %2953 = vmatprep.subr.bf16.mxu0 %v2538
    %2954 = vmatpush1.bf16.msra.mxu0 %v2537
    %2955 = vmatprep.subr.bf16.mxu0 %v2544
    %2956 = vmatpush1.bf16.msra.mxu0 %v2543
    %2957 = vmatprep.subr.bf16.mxu0 %v2550
    %2958 = vmatpush1.bf16.msra.mxu0 %v2549
    %2959 = vmatprep.subr.bf16.mxu0 %v2556
    %2960 = vmatpush1.bf16.msra.mxu0 %v2555
    %2961 = vmatprep.subr.bf16.mxu0 %v2562
    %2962 = vmatpush1.bf16.msra.mxu0 %v2561
    %2963 = vmatprep.subr.bf16.mxu0 %v2568
    %2964 = vmatpush1.bf16.msra.mxu0 %v2567
    %2965 = vmatprep.subr.bf16.mxu0 %v2574
    %2966 = vmatpush1.bf16.msra.mxu0 %v2573
    %2967 = vmatprep.subr.bf16.mxu0 %v2580
    %2968 = vmatpush1.bf16.msra.mxu0 %v2579
    %2969 = vmatprep.mubr.bf16.mxu0 %v1907
    %2970 = vmatmul.mubr.bf16.gmra.mrb[0].mxu0 %v1906
    %v2971 = vpop.f32.mrb[0].mxu0
    %v2972 = vadd.f32 0.0, %v2971
    %v2973 = vpop.f32.mrb[0].mxu0
    %v2974 = vadd.f32 0.0, %v2973
    %v2975 = vpop.f32.mrb[0].mxu0
    %v2976 = vpop.f32.mrb[0].mxu0
    %2977 = vdwg.mxu0
    %2978 = vmatprep.subr.bf16.mxu0 %v2586
    %2979 = vmatpush1.bf16.msra.mxu0 %v2585
    %2980 = vmatprep.subr.bf16.mxu0 %v2592
    %2981 = vmatpush1.bf16.msra.mxu0 %v2591
    %2982 = vmatprep.subr.bf16.mxu0 %v2598
    %2983 = vmatpush1.bf16.msra.mxu0 %v2597
    %2984 = vmatprep.subr.bf16.mxu0 %v2604
    %2985 = vmatpush1.bf16.msra.mxu0 %v2603
    %2986 = vmatprep.subr.bf16.mxu0 %v2610
    %2987 = vmatpush1.bf16.msra.mxu0 %v2609
    %2988 = vmatprep.subr.bf16.mxu0 %v2616
    %2989 = vmatpush1.bf16.msra.mxu0 %v2615
    %2990 = vmatprep.subr.bf16.mxu0 %v2622
    %2991 = vmatpush1.bf16.msra.mxu0 %v2621
    %2992 = vmatprep.subr.bf16.mxu0 %v2628
    %2993 = vmatpush1.bf16.msra.mxu0 %v2627
    %2994 = vmatprep.subr.bf16.mxu0 0
    %2995 = vmatpush1.bf16.msra.mxu0 0
    %2996 = vmatprep.subr.bf16.mxu0 0
    %2997 = vmatpush1.bf16.msra.mxu0 0
    %2998 = vmatprep.subr.bf16.mxu0 0
    %2999 = vmatpush1.bf16.msra.mxu0 0
    %3000 = vmatprep.subr.bf16.mxu0 0
    %3001 = vmatpush1.bf16.msra.mxu0 0
    %3002 = vmatprep.subr.bf16.mxu0 0
    %3003 = vmatpush1.bf16.msra.mxu0 0
    %3004 = vmatprep.subr.bf16.mxu0 0
    %3005 = vmatpush1.bf16.msra.mxu0 0
    %3006 = vmatprep.subr.bf16.mxu0 0
    %3007 = vmatpush1.bf16.msra.mxu0 0
    %3008 = vmatprep.subr.bf16.mxu0 0
    %3009 = vmatpush1.bf16.msra.mxu0 0
    %3010 = vmatprep.mubr.bf16.mxu0 0
    %3011 = vmatmul.mubr.bf16.gmra.mrb[0].mxu0 %v1908
    %v3012 = vpop.f32.mrb[0].mxu0
    %v3013 = vadd.f32 %v2972, %v3012
    %v3014 = vpop.f32.mrb[0].mxu0
    %v3015 = vadd.f32 %v2974, %v3014
    %v3016 = vpop.f32.mrb[0].mxu0
    %v3017 = vpop.f32.mrb[0].mxu0
    %3018 = vdwg.mxu0
    %v3019 = vmax.f32 %v2849, %v2933
    %v3020 = vmax.f32 %v2851, %v3013
    %v3021 = vmax.f32 %v2931, %v3015
    %v3022 = vld [vmem:[%s4] sm:$0x7]
    %v3024 = vlaneseq
    %v3025 = vshrl.u32 %v3024, 7
    %v3026 = vsub.s32 0, %v3025
    %v3027 = vrot.slane %v3022, %v3026
    %v3028 = vlaneseq
    %v3029 = vshrl.u32 %v3028, 7
    %v3030 = vsub.s32 1, %v3029
    %v3031 = vrot.slane %v3022, %v3030
    %v3032 = vlaneseq
    %v3033 = vshrl.u32 %v3032, 7
    %v3034 = vsub.s32 2, %v3033
    %v3035 = vrot.slane %v3022, %v3034
    %v3039 = vadd.f32 %v3019, %v3027
    %v3040 = vadd.f32 %v3020, %v3031
    %v3041 = vadd.f32 %v3021, %v3035
    %v3042 = vmax.f32 %v3039, 0.0
    %v3043 = vmax.f32 %v3040, 0.0
    %v3044 = vmax.f32 %v3041, 0.0
    %v3045 = vpack.c.bf16 %v3042, %v3042
    %v3046 = vpack.c.bf16 %v3043, %v3043
    %v3047 = vpack.c.bf16 %v3044, %v3044
    %v3048 = vld [vmem:[%s5] sm:$0xf]
    %v3049 = vld [vmem:[%s5 + $0x4] sm:$0xf]
    %v3050 = vld [vmem:[%s5 + $0x8] sm:$0xf]
    %v3051 = vld [vmem:[%s5 + $0xc] sm:$0xf]
    %v3052 = vld [vmem:[%s5 + $0x10] sm:$0xf]
    %v3053 = vld [vmem:[%s5 + $0x14] sm:$0xf]
    %v3054 = vld [vmem:[%s5 + $0x18] sm:$0xf]
    %v3055 = vld [vmem:[%s5 + $0x1c] sm:$0xf]
    %v3056 = vld [vmem:[%s5 + $0x20] sm:$0xf]
    %v3057 = vld [vmem:[%s5 + $0x24] sm:$0xf]
    %v3058 = vld [vmem:[%s5 + $0x28] sm:$0xf]
    %v3059 = vld [vmem:[%s5 + $0x2c] sm:$0xf]
    %v3060 = vld [vmem:[%s5 + $0x30] sm:$0xf]
    %v3061 = vld [vmem:[%s5 + $0x34] sm:$0xf]
    %v3062 = vld [vmem:[%s5 + $0x38] sm:$0xf]
    %v3063 = vld [vmem:[%s5 + $0x3c] sm:$0xf]
    %v3064 = vld [vmem:[%s5 + $0x40] sm:$0xf]
    %v3065 = vld [vmem:[%s5 + $0x44] sm:$0xf]
    %v3066 = vld [vmem:[%s5 + $0x48] sm:$0xf]
    %v3067 = vld [vmem:[%s5 + $0x4c] sm:$0xf]
    %v3068 = vld [vmem:[%s5 + $0x50] sm:$0xf]
    %v3069 = vld [vmem:[%s5 + $0x54] sm:$0xf]
    %v3070 = vld [vmem:[%s5 + $0x58] sm:$0xf]
    %v3071 = vld [vmem:[%s5 + $0x5c] sm:$0xf]
    %v3072 = vld [vmem:[%s5 + $0x60] sm:$0xf]
    %v3073 = vld [vmem:[%s5 + $0x64] sm:$0xf]
    %v3074 = vld [vmem:[%s5 + $0x68] sm:$0xf]
    %v3075 = vld [vmem:[%s5 + $0x6c] sm:$0xf]
    %v3076 = vld [vmem:[%s5 + $0x70] sm:$0xf]
    %v3077 = vld [vmem:[%s5 + $0x74] sm:$0xf]
    %v3078 = vld [vmem:[%s5 + $0x78] sm:$0xf]
    %v3079 = vld [vmem:[%s5 + $0x7c] sm:$0xf]
    %v3080 = vld [vmem:[%s5 + $0x80] sm:$0xf]
    %v3081 = vld [vmem:[%s5 + $0x84] sm:$0xf]
    %v3082 = vld [vmem:[%s5 + $0x88] sm:$0xf]
    %v3083 = vld [vmem:[%s5 + $0x8c] sm:$0xf]
    %v3084 = vld [vmem:[%s5 + $0x90] sm:$0xf]
    %v3085 = vld [vmem:[%s5 + $0x94] sm:$0xf]
    %v3086 = vld [vmem:[%s5 + $0x98] sm:$0xf]
    %v3087 = vld [vmem:[%s5 + $0x9c] sm:$0xf]
    %v3088 = vld [vmem:[%s5 + $0xa0] sm:$0xf]
    %v3089 = vld [vmem:[%s5 + $0xa4] sm:$0xf]
    %v3090 = vld [vmem:[%s5 + $0xa8] sm:$0xf]
    %v3091 = vld [vmem:[%s5 + $0xac] sm:$0xf]
    %v3092 = vld [vmem:[%s5 + $0xb0] sm:$0xf]
    %v3093 = vld [vmem:[%s5 + $0xb4] sm:$0xf]
    %v3094 = vld [vmem:[%s5 + $0xb8] sm:$0xf]
    %v3095 = vld [vmem:[%s5 + $0xbc] sm:$0xf]
    %v3096 = vld [vmem:[%s6] sm:$0x1]
    %v3098 = vlaneseq
    %v3099 = vshrl.u32 %v3098, 7
    %v3100 = vsub.s32 0, %v3099
    %v3101 = vrot.slane %v3096, %v3100
    %v3151 = vunpack.c.l.b16 %v3048
    %v3152 = vunpack.c.l.b16 %v3049
    %v3153 = vunpack.c.l.b16 %v3050
    %v3154 = vunpack.c.l.b16 %v3051
    %v3155 = vunpack.c.l.b16 %v3052
    %v3156 = vunpack.c.l.b16 %v3053
    %v3157 = vunpack.c.l.b16 %v3054
    %v3158 = vunpack.c.l.b16 %v3055
    %v3159 = vunpack.c.l.b16 %v3056
    %v3160 = vunpack.c.l.b16 %v3057
    %v3161 = vunpack.c.l.b16 %v3058
    %v3162 = vunpack.c.l.b16 %v3059
    %v3163 = vunpack.c.l.b16 %v3060
    %v3164 = vunpack.c.l.b16 %v3061
    %v3165 = vunpack.c.l.b16 %v3062
    %v3166 = vunpack.c.l.b16 %v3063
    %v3167 = vunpack.c.l.b16 %v3064
    %v3168 = vunpack.c.l.b16 %v3065
    %v3169 = vunpack.c.l.b16 %v3066
    %v3170 = vunpack.c.l.b16 %v3067
    %v3171 = vunpack.c.l.b16 %v3068
    %v3172 = vunpack.c.l.b16 %v3069
    %v3173 = vunpack.c.l.b16 %v3070
    %v3174 = vunpack.c.l.b16 %v3071
    %v3175 = vunpack.c.l.b16 %v3072
    %v3176 = vunpack.c.l.b16 %v3073
    %v3177 = vunpack.c.l.b16 %v3074
    %v3178 = vunpack.c.l.b16 %v3075
    %v3179 = vunpack.c.l.b16 %v3076
    %v3180 = vunpack.c.l.b16 %v3077
    %v3181 = vunpack.c.l.b16 %v3078
    %v3182 = vunpack.c.l.b16 %v3079
    %v3183 = vunpack.c.l.b16 %v3080
    %v3184 = vunpack.c.l.b16 %v3081
    %v3185 = vunpack.c.l.b16 %v3082
    %v3186 = vunpack.c.l.b16 %v3083
    %v3187 = vunpack.c.l.b16 %v3084
    %v3188 = vunpack.c.l.b16 %v3085
    %v3189 = vunpack.c.l.b16 %v3086
    %v3190 = vunpack.c.l.b16 %v3087
    %v3191 = vunpack.c.l.b16 %v3088
    %v3192 = vunpack.c.l.b16 %v3089
    %v3193 = vunpack.c.l.b16 %v3090
    %v3194 = vunpack.c.l.b16 %v3091
    %v3195 = vunpack.c.l.b16 %v3092
    %v3196 = vunpack.c.l.b16 %v3093
    %v3197 = vunpack.c.l.b16 %v3094
    %v3198 = vunpack.c.l.b16 %v3095
    %v3199 = vpack.c.b16 %v3152, %v3151
    %v3200 = vpack.c.b16 %v3154, %v3153
    %v3201 = vpack.c.b16 %v3156, %v3155
    %v3202 = vpack.c.b16 %v3158, %v3157
    %v3203 = vpack.c.b16 %v3160, %v3159
    %v3204 = vpack.c.b16 %v3162, %v3161
    %v3205 = vpack.c.b16 %v3164, %v3163
    %v3206 = vpack.c.b16 %v3166, %v3165
    %v3207 = vpack.c.b16 %v3168, %v3167
    %v3208 = vpack.c.b16 %v3170, %v3169
    %v3209 = vpack.c.b16 %v3172, %v3171
    %v3210 = vpack.c.b16 %v3174, %v3173
    %v3211 = vpack.c.b16 %v3176, %v3175
    %v3212 = vpack.c.b16 %v3178, %v3177
    %v3213 = vpack.c.b16 %v3180, %v3179
    %v3214 = vpack.c.b16 %v3182, %v3181
    %v3215 = vpack.c.b16 %v3184, %v3183
    %v3216 = vpack.c.b16 %v3186, %v3185
    %v3217 = vpack.c.b16 %v3188, %v3187
    %v3218 = vpack.c.b16 %v3190, %v3189
    %v3219 = vpack.c.b16 %v3192, %v3191
    %v3220 = vpack.c.b16 %v3194, %v3193
    %v3221 = vpack.c.b16 %v3196, %v3195
    %v3222 = vpack.c.b16 %v3198, %v3197
    %3247 = vmatprep.subr.bf16.mxu0 0
    %3248 = vmatpush1.bf16.msra.mxu0 %v3199
    %3249 = vmatprep.subr.bf16.mxu0 0
    %3250 = vmatpush1.bf16.msra.mxu0 %v3200
    %3251 = vmatprep.subr.bf16.mxu0 0
    %3252 = vmatpush1.bf16.msra.mxu0 %v3201
    %3253 = vmatprep.subr.bf16.mxu0 0
    %3254 = vmatpush1.bf16.msra.mxu0 %v3202
    %3255 = vmatprep.subr.bf16.mxu0 0
    %3256 = vmatpush1.bf16.msra.mxu0 %v3203
    %3257 = vmatprep.subr.bf16.mxu0 0
    %3258 = vmatpush1.bf16.msra.mxu0 %v3204
    %3259 = vmatprep.subr.bf16.mxu0 0
    %3260 = vmatpush1.bf16.msra.mxu0 %v3205
    %3261 = vmatprep.subr.bf16.mxu0 0
    %3262 = vmatpush1.bf16.msra.mxu0 %v3206
    %3263 = vmatprep.subr.bf16.mxu0 0
    %3264 = vmatpush1.bf16.msra.mxu0 %v3207
    %3265 = vmatprep.subr.bf16.mxu0 0
    %3266 = vmatpush1.bf16.msra.mxu0 %v3208
    %3267 = vmatprep.subr.bf16.mxu0 0
    %3268 = vmatpush1.bf16.msra.mxu0 %v3209
    %3269 = vmatprep.subr.bf16.mxu0 0
    %3270 = vmatpush1.bf16.msra.mxu0 %v3210
    %3271 = vmatprep.subr.bf16.mxu0 0
    %3272 = vmatpush1.bf16.msra.mxu0 %v3211
    %3273 = vmatprep.subr.bf16.mxu0 0
    %3274 = vmatpush1.bf16.msra.mxu0 %v3212
    %3275 = vmatprep.subr.bf16.mxu0 0
    %3276 = vmatpush1.bf16.msra.mxu0 %v3213
    %3277 = vmatprep.subr.bf16.mxu0 0
    %3278 = vmatpush1.bf16.msra.mxu0 %v3214
    %3279 = vmatprep.mubr.bf16.mxu0 %v3046
    %3280 = vmatmul.mubr.bf16.gmra.mrb[0].mxu0 %v3045
    %v3281 = vpop.f32.mrb[0].mxu0
    %v3282 = vadd.f32 %v3101, %v3281
    %v3283 = vpop.f32.mrb[0].mxu0
    %v3284 = vpop.f32.mrb[0].mxu0
    %v3285 = vpop.f32.mrb[0].mxu0
    %3286 = vdwg.mxu0
    %3287 = vmatprep.subr.bf16.mxu0 0
    %3288 = vmatpush1.bf16.msra.mxu0 %v3215
    %3289 = vmatprep.subr.bf16.mxu0 0
    %3290 = vmatpush1.bf16.msra.mxu0 %v3216
    %3291 = vmatprep.subr.bf16.mxu0 0
    %3292 = vmatpush1.bf16.msra.mxu0 %v3217
    %3293 = vmatprep.subr.bf16.mxu0 0
    %3294 = vmatpush1.bf16.msra.mxu0 %v3218
    %3295 = vmatprep.subr.bf16.mxu0 0
    %3296 = vmatpush1.bf16.msra.mxu0 %v3219
    %3297 = vmatprep.subr.bf16.mxu0 0
    %3298 = vmatpush1.bf16.msra.mxu0 %v3220
    %3299 = vmatprep.subr.bf16.mxu0 0
    %3300 = vmatpush1.bf16.msra.mxu0 %v3221
    %3301 = vmatprep.subr.bf16.mxu0 0
    %3302 = vmatpush1.bf16.msra.mxu0 %v3222
    %3303 = vmatprep.subr.bf16.mxu0 0
    %3304 = vmatpush1.bf16.msra.mxu0 0
    %3305 = vmatprep.subr.bf16.mxu0 0
    %3306 = vmatpush1.bf16.msra.mxu0 0
    %3307 = vmatprep.subr.bf16.mxu0 0
    %3308 = vmatpush1.bf16.msra.mxu0 0
    %3309 = vmatprep.subr.bf16.mxu0 0
    %3310 = vmatpush1.bf16.msra.mxu0 0
    %3311 = vmatprep.subr.bf16.mxu0 0
    %3312 = vmatpush1.bf16.msra.mxu0 0
    %3313 = vmatprep.subr.bf16.mxu0 0
    %3314 = vmatpush1.bf16.msra.mxu0 0
    %3315 = vmatprep.subr.bf16.mxu0 0
    %3316 = vmatpush1.bf16.msra.mxu0 0
    %3317 = vmatprep.subr.bf16.mxu0 0
    %3318 = vmatpush1.bf16.msra.mxu0 0
    %3319 = vmatprep.mubr.bf16.mxu0 0
    %3320 = vmatmul.mubr.bf16.gmra.mrb[0].mxu0 %v3047
    %v3321 = vpop.f32.mrb[0].mxu0
    %v3322 = vadd.f32 %v3282, %v3321
    %v3323 = vpop.f32.mrb[0].mxu0
    %v3324 = vpop.f32.mrb[0].mxu0
    %v3325 = vpop.f32.mrb[0].mxu0
    %3326 = vdwg.mxu0
    %v3327 = vmax.f32 %v3322, 0.0
    %v3328 = vpack.c.bf16 %v3327, %v3327
    %v3329 = vld [vmem:[%s7] sm:$0xf]
    %v3330 = vld [vmem:[%s7 + $0x4] sm:$0xf]
    %v3331 = vld [vmem:[%s7 + $0x8] sm:$0xf]
    %v3332 = vld [vmem:[%s7 + $0xc] sm:$0xf]
    %v3333 = vld [vmem:[%s7 + $0x10] sm:$0xf]
    %v3334 = vld [vmem:[%s7 + $0x14] sm:$0xf]
    %v3335 = vld [vmem:[%s7 + $0x18] sm:$0xf]
    %v3336 = vld [vmem:[%s7 + $0x1c] sm:$0xf]
    %v3337 = vld [vmem:[%s8] sm:$0x1]
    %v3339 = vlaneseq
    %v3340 = vshrl.u32 %v3339, 7
    %v3341 = vsub.s32 0, %v3340
    %v3342 = vrot.slane %v3337, %v3341
    %v3352 = vunpack.c.l.b16 %v3329
    %v3353 = vunpack.c.l.b16 %v3330
    %v3354 = vunpack.c.l.b16 %v3331
    %v3355 = vunpack.c.l.b16 %v3332
    %v3356 = vunpack.c.l.b16 %v3333
    %v3357 = vunpack.c.l.b16 %v3334
    %v3358 = vunpack.c.l.b16 %v3335
    %v3359 = vunpack.c.l.b16 %v3336
    %v3360 = vpack.c.b16 %v3353, %v3352
    %v3361 = vpack.c.b16 %v3355, %v3354
    %v3362 = vpack.c.b16 %v3357, %v3356
    %v3363 = vpack.c.b16 %v3359, %v3358
    %vm3368 = vcmask 523264
    %v3370 = vsel %vm3368, %v3328, 0
    %3372 = vmatprep.subr.bf16.mxu0 0
    %3373 = vmatpush1.bf16.msra.mxu0 %v3360
    %3374 = vmatprep.subr.bf16.mxu0 0
    %3375 = vmatpush1.bf16.msra.mxu0 %v3361
    %3376 = vmatprep.subr.bf16.mxu0 0
    %3377 = vmatpush1.bf16.msra.mxu0 %v3362
    %3378 = vmatprep.subr.bf16.mxu0 0
    %3379 = vmatpush1.bf16.msra.mxu0 %v3363
    %3380 = vmatprep.subr.bf16.mxu0 0
    %3381 = vmatpush1.bf16.msra.mxu0 0
    %3382 = vmatprep.subr.bf16.mxu0 0
    %3383 = vmatpush1.bf16.msra.mxu0 0
    %3384 = vmatprep.subr.bf16.mxu0 0
    %3385 = vmatpush1.bf16.msra.mxu0 0
    %3386 = vmatprep.subr.bf16.mxu0 0
    %3387 = vmatpush1.bf16.msra.mxu0 0
    %3388 = vmatprep.subr.bf16.mxu0 0
    %3389 = vmatpush1.bf16.msra.mxu0 0
    %3390 = vmatprep.subr.bf16.mxu0 0
    %3391 = vmatpush1.bf16.msra.mxu0 0
    %3392 = vmatprep.subr.bf16.mxu0 0
    %3393 = vmatpush1.bf16.msra.mxu0 0
    %3394 = vmatprep.subr.bf16.mxu0 0
    %3395 = vmatpush1.bf16.msra.mxu0 0
    %3396 = vmatprep.subr.bf16.mxu0 0
    %3397 = vmatpush1.bf16.msra.mxu0 0
    %3398 = vmatprep.subr.bf16.mxu0 0
    %3399 = vmatpush1.bf16.msra.mxu0 0
    %3400 = vmatprep.subr.bf16.mxu0 0
    %3401 = vmatpush1.bf16.msra.mxu0 0
    %3402 = vmatprep.subr.bf16.mxu0 0
    %3403 = vmatpush1.bf16.msra.mxu0 0
    %3404 = vmatprep.mubr.bf16.mxu0 0
    %3405 = vmatmul.mubr.bf16.gmra.mrb[0].mxu0 %v3370
    %v3406 = vpop.f32.mrb[0].mxu0
    %v3407 = vadd.f32 %v3342, %v3406
    %v3408 = vpop.f32.mrb[0].mxu0
    %v3409 = vpop.f32.mrb[0].mxu0
    %v3410 = vpop.f32.mrb[0].mxu0
    %3411 = vdwg.mxu0
    %3412 = vst [vmem:[%s9] sm:$0xff] %v3407
    // Predicated region
    $region46: #{cnn_forward.1} parent=1 // pred_check
      _
    $region47: #{cnn_forward.1} parent=1 // pred_check_branch
      %3414 = sbr.rel (0) target = $region49
    $region48: #{cnn_forward.1} parent=1 // pred_region
      _
    $region49: #{cnn_forward.1} parent=1 // pred_fallthru
      _
    // Predicated region
    $region50: #{cnn_forward.1} parent=1 // pred_check
      _
    $region51: #{cnn_forward.1} parent=1 // pred_check_branch
      %3416 = sbr.rel (0) target = $region53
    $region52: #{cnn_forward.1} parent=1 // pred_region
      _
    $region53: #{cnn_forward.1} parent=1 // pred_fallthru
      _
    %3417 = vsyncpa [#allocation3], 1
    %3418 = vsyncpa [#allocation5], 1

</llo_original>
